<compile_context>
chip_gen: v7x
topology: tpu7x:2x2x1
jax: 0.10.0
libtpu: 0.0.40
codegen_flags: <defaults>
</compile_context>

<pallas_src>
import functools

import jax
import jax.numpy as jnp
import numpy as np
from jax.experimental import pallas as pl
from jax.experimental.pallas import tpu as pltpu

# bf16 GEMM operands / inter-layer activations; accumulation and the BN / tanh
# epilogue stay in f32 (required anyway on v5e, which has no bf16 VPU/EUP).
USE_BF16_MATMUL = True
_ACT_DTYPE = jnp.bfloat16 if USE_BF16_MATMUL else jnp.float32
_BN_EPS = 1e-5


# ----------------------------------------------------------------------------
# Pallas kernels
# ----------------------------------------------------------------------------
def _convT_bn_relu_kernel(xcT_ref, wT_ref, o_ref):
    """ConvTranspose2d (folded GEMM, bias cancelled by BN) + BatchNorm2d + ReLU.

    xcT_ref: (N, D, P)   im2col^T of the dilated+padded input, D = K*K*Cin,
                         P = OH*OW (lane axis -> dense stores / dense epilogue)
    wT_ref : (Cout, D)   flipped+folded ConvTranspose weights, transposed
    o_ref  : (N, Cout, P)
    """
    n_batch = xcT_ref.shape[0]
    w = wT_ref[...]
    # One MXU GEMM per batch element (N is tiny); contraction depth D=128..512.
    ys = [jnp.dot(w, xcT_ref[i], preferred_element_type=jnp.float32)
          for i in range(n_batch)]

    # BatchNorm2d, training mode: per-channel stats over (N, OH, OW); biased
    # variance, eps=1e-5, gamma=1, beta=0 (PyTorch default init).
    # Single-pass statistics: sum and sum-of-squares in one sweep.
    p = ys[0].shape[1]
    inv_cnt = 1.0 / float(n_batch * p)
    s = ys[0].sum(axis=1, keepdims=True)
    ss = (ys[0] * ys[0]).sum(axis=1, keepdims=True)
    for y in ys[1:]:
        s = s + y.sum(axis=1, keepdims=True)
        ss = ss + (y * y).sum(axis=1, keepdims=True)
    mean = s * inv_cnt                              # (Cout, 1)
    var = ss * inv_cnt - mean * mean
    scale = jax.lax.rsqrt(var + _BN_EPS)
    for i, y in enumerate(ys):
        o_ref[i] = jnp.maximum((y - mean) * scale, 0.0).astype(o_ref.dtype)


def _convT_tanh_kernel(xcT_ref, wT_ref, b_ref, o_ref):
    """Final ConvTranspose2d + bias + tanh; one batch element per grid step."""
    y = jnp.dot(wT_ref[...], xcT_ref[0], preferred_element_type=jnp.float32)
    y = y + b_ref[...]                              # (Cout, 1) lane-broadcast
    o_ref[0] = jnp.tanh(y).astype(o_ref.dtype)


def _bn_relu_layer(xcT, wT):
    """Whole batch in one block (BatchNorm needs global batch statistics)."""
    n, _d, p = xcT.shape
    cout = wT.shape[0]
    vmem = pl.BlockSpec(memory_space=pltpu.MemorySpace.VMEM)
    return pl.pallas_call(
        _convT_bn_relu_kernel,
        out_shape=jax.ShapeDtypeStruct((n, cout, p), _ACT_DTYPE),
        in_specs=[vmem, vmem],
        out_specs=vmem,
    )(xcT, wT)


def _tanh_layer(xcT, wT, b):
    """Batch-parallel grid: uses both v7x TensorCores + double-buffered DMA."""
    n, d, p = xcT.shape
    cout = wT.shape[0]
    return pl.pallas_call(
        _convT_tanh_kernel,
        out_shape=jax.ShapeDtypeStruct((n, cout, p), jnp.float32),
        grid=(n,),
        in_specs=[
            pl.BlockSpec((1, d, p), lambda i: (i, 0, 0)),
            pl.BlockSpec((cout, d), lambda i: (0, 0)),
            pl.BlockSpec((cout, 1), lambda i: (0, 0)),
        ],
        out_specs=pl.BlockSpec((1, cout, p), lambda i: (i, 0, 0)),
        compiler_params=pltpu.CompilerParams(dimension_semantics=("parallel",)),
    )(xcT, wT, b)


# ----------------------------------------------------------------------------
# One-time weight folding (done at init, not per forward call)
# ----------------------------------------------------------------------------
def _patch_perm(cin, k):
    """perm[f] = flattened (c, kh, kw) id captured by patch feature f.

    Determined numerically (two small eager probes with integer values, exact
    in any precision) so the folded weights always match the feature ordering
    of lax.conv_general_dilated_patches with NCHW dimension numbers.
    """
    kk = k * k

    def patches(x):
        return jax.lax.conv_general_dilated_patches(
            x, filter_shape=(k, k), window_strides=(1, 1),
            padding=[(0, 0), (0, 0)],
            dimension_numbers=("NCHW", "OIHW", "NCHW"))

    chan_probe = jnp.broadcast_to(
        jnp.arange(cin, dtype=jnp.float32).reshape(1, cin, 1, 1), (1, cin, k, k))
    spat_probe = jnp.broadcast_to(
        jnp.arange(kk, dtype=jnp.float32).reshape(1, 1, k, k), (1, cin, k, k))
    c_f = np.rint(np.asarray(patches(chan_probe)).reshape(-1)).astype(np.int64)
    s_f = np.rint(np.asarray(patches(spat_probe)).reshape(-1)).astype(np.int64)
    return c_f * kk + s_f


def _fold_weight_T(w_t, perm):
    """ConvTranspose2d weight (Cin, Cout, K, K) -> transposed GEMM matrix (Cout, K*K*Cin)."""
    cin, cout, k, _ = w_t.shape
    w_flip = w_t[:, :, ::-1, ::-1]                              # spatial flip
    w_by_id = jnp.transpose(w_flip, (0, 2, 3, 1)).reshape(cin * k * k, cout)
    return jnp.transpose(w_by_id[perm])                         # rows match patch features


def make_layer_specs(input_size, hidden_size, output_size):
    # (Cin, Cout, K, stride, padding) -- mirrors ConvGenerator.__init__
    return (
        (input_size, hidden_size * 4, 4, 1, 0),
        (hidden_size * 4, hidden_size * 2, 4, 2, 1),
        (hidden_size * 2, hidden_size, 4, 2, 1),
        (hidden_size, output_size, 4, 2, 3),
    )


def init_params(key, specs):
    """Weights ~ N(0, 0.02), bias = 0 (matches the PyTorch module init)."""
    raw_params, folded_params = [], []
    n_layers = len(specs)
    for li, (cin, cout, k, _s, _p) in enumerate(specs):
        key, sub = jax.random.split(key)
        w = 0.02 * jax.random.normal(sub, (cin, cout, k, k), jnp.float32)
        b = jnp.zeros((cout,), jnp.float32)
        raw_params.append((w, b))
        perm = _patch_perm(cin, k)
        wT = _fold_weight_T(w, perm).astype(_ACT_DTYPE)         # (Cout, K*K*Cin)
        # Bias is only needed for the last (tanh) layer: train-mode BatchNorm
        # with gamma=1, beta=0 cancels a per-channel bias exactly.
        b_col = b.reshape(cout, 1) if li == n_layers - 1 else None
        folded_params.append((wT, b_col))
    return raw_params, folded_params


# ----------------------------------------------------------------------------
# Forward pass (NCHW in / NCHW out), jit-able
# ----------------------------------------------------------------------------
def conv_generator_forward(x_nchw, folded_params, specs):
    n = x_nchw.shape[0]
    x = x_nchw.astype(_ACT_DTYPE)                               # NCHW throughout
    n_layers = len(specs)
    for li, ((cin, cout, k, s, p), (wT, b)) in enumerate(zip(specs, folded_params)):
        last = li == n_layers - 1
        h, w_sp = x.shape[2], x.shape[3]
        oh = (h - 1) * s - 2 * p + k
        ow = (w_sp - 1) * s - 2 * p + k
        pad = k - 1 - p
        # transposed conv == zero-insert (lhs_dilation=s) + pad (K-1-p) + regular
        # conv with the spatially-flipped kernel; one XLA op builds the im2col
        # directly in the transposed (N, K*K*Cin, OH*OW) layout the kernel
        # consumes (pure data movement, default precision, bf16).
        patches = jax.lax.conv_general_dilated_patches(
            x, filter_shape=(k, k), window_strides=(1, 1),
            padding=[(pad, pad), (pad, pad)], lhs_dilation=(s, s),
            dimension_numbers=("NCHW", "OIHW", "NCHW"))         # (N, Cin*K*K, OH, OW)
        xcT = patches.reshape(n, cin * k * k, oh * ow)
        if last:
            y = _tanh_layer(xcT, wT, b)                         # (N, Cout, OH*OW) f32
        else:
            y = _bn_relu_layer(xcT, wT)                         # (N, Cout, OH*OW) bf16
        x = y.reshape(n, cout, oh, ow)                          # already NCHW
    return x


# ----------------------------------------------------------------------------
# Pure-JAX reference (independent f32 path through XLA conv) for validation
# ----------------------------------------------------------------------------
def ref_forward(x_nchw, raw_params, specs):
    x = jnp.transpose(x_nchw, (0, 2, 3, 1)).astype(jnp.float32)
    n_layers = len(specs)
    for li, ((_cin, _cout, k, s, p), (w_t, b)) in enumerate(zip(specs, raw_params)):
        w_conv = jnp.transpose(w_t[:, :, ::-1, ::-1], (2, 3, 0, 1))  # HWIO
        pad = k - 1 - p
        x = jax.lax.conv_general_dilated(
            x, w_conv, window_strides=(1, 1),
            padding=[(pad, pad), (pad, pad)], lhs_dilation=(s, s),
            dimension_numbers=("NHWC", "HWIO", "NHWC"),
            precision=jax.lax.Precision.HIGHEST) + b[None, None, None, :]
        if li == n_layers - 1:
            x = jnp.tanh(x)
        else:
            mean = jnp.mean(x, axis=(0, 1, 2), keepdims=True)
            var = jnp.mean(jnp.square(x - mean), axis=(0, 1, 2), keepdims=True)
            x = jnp.maximum((x - mean) * jax.lax.rsqrt(var + _BN_EPS), 0.0)
    return jnp.transpose(x, (0, 3, 1, 2))


# ----------------------------------------------------------------------------
if __name__ == "__main__":
    key = jax.random.PRNGKey(0)
    kx, kp = jax.random.split(key)

    batch, input_size, hidden_size, output_size = 2, 16, 8, 3
    specs = make_layer_specs(input_size, hidden_size, output_size)

    # DCGAN-style latent, NCHW like the PyTorch module expects.
    x = jax.random.normal(kx, (batch, input_size, 1, 1), jnp.float32)
    raw_params, folded_params = init_params(kp, specs)

    fwd = jax.jit(functools.partial(conv_generator_forward, specs=specs))
    out = jax.block_until_ready(fwd(x, folded_params))
    assert out.shape == (batch, output_size, 28, 28), out.shape

    ref = jax.block_until_ready(ref_forward(x, raw_params, specs))
    # bf16 GEMM operands / bf16 inter-layer activations vs. a full-f32
    # reference: a few % relative on ~O(0.1) outputs; structural errors
    # (wrong tap order / BN semantics) would be O(1) and still caught.
    tol = 5e-2 if USE_BF16_MATMUL else 5e-4
    np.testing.assert_allclose(np.asarray(out), np.asarray(ref),
                               rtol=tol, atol=tol)
    print("KERNEL_OK")
</pallas_src>

<mosaic_0001>
module attributes {stable_mosaic.version = 11 : i64} {
  func.func @_convT_bn_relu_kernel(%arg0: memref<2x256x16xbf16, #tpu.memory_space<vmem>>, %arg1: memref<32x256xbf16, #tpu.memory_space<vmem>>, %arg2: memref<2x32x16xbf16, #tpu.memory_space<vmem>>) attributes {dimension_semantics = [], scalar_prefetch = 0 : i64, scratch_operands = 0 : i64, tpu.core_type = #tpu.core_type<tc>} {
    %c0 = arith.constant 0 : index
    %c0_0 = arith.constant 0 : index
    %0 = vector.load %arg1[%c0, %c0_0] : memref<32x256xbf16, #tpu.memory_space<vmem>>, vector<32x256xbf16>
    %c0_1 = arith.constant 0 : index
    %c0_2 = arith.constant 0 : index
    %c0_3 = arith.constant 0 : index
    %1 = vector.load %arg0[%c0_1, %c0_2, %c0_3] : memref<2x256x16xbf16, #tpu.memory_space<vmem>>, vector<1x256x16xbf16>
    %2 = vector.shape_cast %1 : vector<1x256x16xbf16> to vector<256x16xbf16>
    %cst = arith.constant dense<0.000000e+00> : vector<32x16xf32>
    %3 = tpu.matmul %0, %2, %cst {dimension_numbers = #tpu.dot_dimension_numbers<[1], [0], [0], [1], [0, 0, 1, 1], [], []>} : vector<32x256xbf16>, vector<256x16xbf16>, vector<32x16xf32> -> vector<32x16xf32>
    %c1 = arith.constant 1 : index
    %c0_4 = arith.constant 0 : index
    %c0_5 = arith.constant 0 : index
    %4 = vector.load %arg0[%c1, %c0_4, %c0_5] : memref<2x256x16xbf16, #tpu.memory_space<vmem>>, vector<1x256x16xbf16>
    %5 = vector.shape_cast %4 : vector<1x256x16xbf16> to vector<256x16xbf16>
    %cst_6 = arith.constant dense<0.000000e+00> : vector<32x16xf32>
    %6 = tpu.matmul %0, %5, %cst_6 {dimension_numbers = #tpu.dot_dimension_numbers<[1], [0], [0], [1], [0, 0, 1, 1], [], []>} : vector<32x256xbf16>, vector<256x16xbf16>, vector<32x16xf32> -> vector<32x16xf32>
    %cst_7 = arith.constant dense<0.000000e+00> : vector<32xf32>
    %7 = vector.multi_reduction <add>, %3, %cst_7 [1] : vector<32x16xf32> to vector<32xf32>
    %8 = vector.shape_cast %7 : vector<32xf32> to vector<32x1xf32>
    %9 = arith.mulf %3, %3 : vector<32x16xf32>
    %cst_8 = arith.constant dense<0.000000e+00> : vector<32xf32>
    %10 = vector.multi_reduction <add>, %9, %cst_8 [1] : vector<32x16xf32> to vector<32xf32>
    %11 = vector.shape_cast %10 : vector<32xf32> to vector<32x1xf32>
    %cst_9 = arith.constant dense<0.000000e+00> : vector<32xf32>
    %12 = vector.multi_reduction <add>, %6, %cst_9 [1] : vector<32x16xf32> to vector<32xf32>
    %13 = vector.shape_cast %12 : vector<32xf32> to vector<32x1xf32>
    %14 = arith.addf %8, %13 : vector<32x1xf32>
    %15 = arith.mulf %6, %6 : vector<32x16xf32>
    %cst_10 = arith.constant dense<0.000000e+00> : vector<32xf32>
    %16 = vector.multi_reduction <add>, %15, %cst_10 [1] : vector<32x16xf32> to vector<32xf32>
    %17 = vector.shape_cast %16 : vector<32xf32> to vector<32x1xf32>
    %18 = arith.addf %11, %17 : vector<32x1xf32>
    %cst_11 = arith.constant 3.125000e-02 : f32
    %19 = vector.broadcast %cst_11 : f32 to vector<32x1xf32>
    %20 = arith.mulf %14, %19 : vector<32x1xf32>
    %cst_12 = arith.constant 3.125000e-02 : f32
    %21 = vector.broadcast %cst_12 : f32 to vector<32x1xf32>
    %22 = arith.mulf %18, %21 : vector<32x1xf32>
    %23 = arith.mulf %20, %20 : vector<32x1xf32>
    %24 = arith.subf %22, %23 : vector<32x1xf32>
    %cst_13 = arith.constant 9.99999974E-6 : f32
    %25 = vector.broadcast %cst_13 : f32 to vector<32x1xf32>
    %26 = arith.addf %24, %25 : vector<32x1xf32>
    %27 = math.rsqrt %26 : vector<32x1xf32>
    %28 = vector.broadcast %20 : vector<32x1xf32> to vector<32x16xf32>
    %29 = arith.subf %3, %28 : vector<32x16xf32>
    %30 = vector.broadcast %27 : vector<32x1xf32> to vector<32x16xf32>
    %31 = arith.mulf %29, %30 : vector<32x16xf32>
    %cst_14 = arith.constant 0.000000e+00 : f32
    %32 = vector.broadcast %cst_14 : f32 to vector<32x16xf32>
    %33 = arith.maximumf %31, %32 : vector<32x16xf32>
    %34 = arith.truncf %33 : vector<32x16xf32> to vector<32x16xbf16>
    %c0_15 = arith.constant 0 : index
    %c0_16 = arith.constant 0 : index
    %c0_17 = arith.constant 0 : index
    %35 = vector.load %arg2[%c0_15, %c0_16, %c0_17] : memref<2x32x16xbf16, #tpu.memory_space<vmem>>, vector<1x32x16xbf16>
    %36 = vector.shape_cast %35 : vector<1x32x16xbf16> to vector<32x16xbf16>
    %37 = vector.shape_cast %34 : vector<32x16xbf16> to vector<1x32x16xbf16>
    tpu.vector_store %arg2[%c0_15, %c0_16, %c0_17], %37 {strides = array<i32>} : memref<2x32x16xbf16, #tpu.memory_space<vmem>>, vector<1x32x16xbf16>,
    %38 = vector.broadcast %20 : vector<32x1xf32> to vector<32x16xf32>
    %39 = arith.subf %6, %38 : vector<32x16xf32>
    %40 = vector.broadcast %27 : vector<32x1xf32> to vector<32x16xf32>
    %41 = arith.mulf %39, %40 : vector<32x16xf32>
    %cst_18 = arith.constant 0.000000e+00 : f32
    %42 = vector.broadcast %cst_18 : f32 to vector<32x16xf32>
    %43 = arith.maximumf %41, %42 : vector<32x16xf32>
    %44 = arith.truncf %43 : vector<32x16xf32> to vector<32x16xbf16>
    %c1_19 = arith.constant 1 : index
    %c0_20 = arith.constant 0 : index
    %c0_21 = arith.constant 0 : index
    %45 = vector.load %arg2[%c1_19, %c0_20, %c0_21] : memref<2x32x16xbf16, #tpu.memory_space<vmem>>, vector<1x32x16xbf16>
    %46 = vector.shape_cast %45 : vector<1x32x16xbf16> to vector<32x16xbf16>
    %47 = vector.shape_cast %44 : vector<32x16xbf16> to vector<1x32x16xbf16>
    tpu.vector_store %arg2[%c1_19, %c0_20, %c0_21], %47 {strides = array<i32>} : memref<2x32x16xbf16, #tpu.memory_space<vmem>>, vector<1x32x16xbf16>,
    return
  }
}

module attributes {stable_mosaic.version = 11 : i64} {
  func.func @_convT_bn_relu_kernel(%arg0: memref<2x512x64xbf16, #tpu.memory_space<vmem>>, %arg1: memref<16x512xbf16, #tpu.memory_space<vmem>>, %arg2: memref<2x16x64xbf16, #tpu.memory_space<vmem>>) attributes {dimension_semantics = [], scalar_prefetch = 0 : i64, scratch_operands = 0 : i64, tpu.core_type = #tpu.core_type<tc>} {
    %c0 = arith.constant 0 : index
    %c0_0 = arith.constant 0 : index
    %0 = vector.load %arg1[%c0, %c0_0] : memref<16x512xbf16, #tpu.memory_space<vmem>>, vector<16x512xbf16>
    %c0_1 = arith.constant 0 : index
    %c0_2 = arith.constant 0 : index
    %c0_3 = arith.constant 0 : index
    %1 = vector.load %arg0[%c0_1, %c0_2, %c0_3] : memref<2x512x64xbf16, #tpu.memory_space<vmem>>, vector<1x512x64xbf16>
    %2 = vector.shape_cast %1 : vector<1x512x64xbf16> to vector<512x64xbf16>
    %cst = arith.constant dense<0.000000e+00> : vector<16x64xf32>
    %3 = tpu.matmul %0, %2, %cst {dimension_numbers = #tpu.dot_dimension_numbers<[1], [0], [0], [1], [0, 0, 1, 1], [], []>} : vector<16x512xbf16>, vector<512x64xbf16>, vector<16x64xf32> -> vector<16x64xf32>
    %c1 = arith.constant 1 : index
    %c0_4 = arith.constant 0 : index
    %c0_5 = arith.constant 0 : index
    %4 = vector.load %arg0[%c1, %c0_4, %c0_5] : memref<2x512x64xbf16, #tpu.memory_space<vmem>>, vector<1x512x64xbf16>
    %5 = vector.shape_cast %4 : vector<1x512x64xbf16> to vector<512x64xbf16>
    %cst_6 = arith.constant dense<0.000000e+00> : vector<16x64xf32>
    %6 = tpu.matmul %0, %5, %cst_6 {dimension_numbers = #tpu.dot_dimension_numbers<[1], [0], [0], [1], [0, 0, 1, 1], [], []>} : vector<16x512xbf16>, vector<512x64xbf16>, vector<16x64xf32> -> vector<16x64xf32>
    %cst_7 = arith.constant dense<0.000000e+00> : vector<16xf32>
    %7 = vector.multi_reduction <add>, %3, %cst_7 [1] : vector<16x64xf32> to vector<16xf32>
    %8 = vector.shape_cast %7 : vector<16xf32> to vector<16x1xf32>
    %9 = arith.mulf %3, %3 : vector<16x64xf32>
    %cst_8 = arith.constant dense<0.000000e+00> : vector<16xf32>
    %10 = vector.multi_reduction <add>, %9, %cst_8 [1] : vector<16x64xf32> to vector<16xf32>
    %11 = vector.shape_cast %10 : vector<16xf32> to vector<16x1xf32>
    %cst_9 = arith.constant dense<0.000000e+00> : vector<16xf32>
    %12 = vector.multi_reduction <add>, %6, %cst_9 [1] : vector<16x64xf32> to vector<16xf32>
    %13 = vector.shape_cast %12 : vector<16xf32> to vector<16x1xf32>
    %14 = arith.addf %8, %13 : vector<16x1xf32>
    %15 = arith.mulf %6, %6 : vector<16x64xf32>
    %cst_10 = arith.constant dense<0.000000e+00> : vector<16xf32>
    %16 = vector.multi_reduction <add>, %15, %cst_10 [1] : vector<16x64xf32> to vector<16xf32>
    %17 = vector.shape_cast %16 : vector<16xf32> to vector<16x1xf32>
    %18 = arith.addf %11, %17 : vector<16x1xf32>
    %cst_11 = arith.constant 7.812500e-03 : f32
    %19 = vector.broadcast %cst_11 : f32 to vector<16x1xf32>
    %20 = arith.mulf %14, %19 : vector<16x1xf32>
    %cst_12 = arith.constant 7.812500e-03 : f32
    %21 = vector.broadcast %cst_12 : f32 to vector<16x1xf32>
    %22 = arith.mulf %18, %21 : vector<16x1xf32>
    %23 = arith.mulf %20, %20 : vector<16x1xf32>
    %24 = arith.subf %22, %23 : vector<16x1xf32>
    %cst_13 = arith.constant 9.99999974E-6 : f32
    %25 = vector.broadcast %cst_13 : f32 to vector<16x1xf32>
    %26 = arith.addf %24, %25 : vector<16x1xf32>
    %27 = math.rsqrt %26 : vector<16x1xf32>
    %28 = vector.broadcast %20 : vector<16x1xf32> to vector<16x64xf32>
    %29 = arith.subf %3, %28 : vector<16x64xf32>
    %30 = vector.broadcast %27 : vector<16x1xf32> to vector<16x64xf32>
    %31 = arith.mulf %29, %30 : vector<16x64xf32>
    %cst_14 = arith.constant 0.000000e+00 : f32
    %32 = vector.broadcast %cst_14 : f32 to vector<16x64xf32>
    %33 = arith.maximumf %31, %32 : vector<16x64xf32>
    %34 = arith.truncf %33 : vector<16x64xf32> to vector<16x64xbf16>
    %c0_15 = arith.constant 0 : index
    %c0_16 = arith.constant 0 : index
    %c0_17 = arith.constant 0 : index
    %35 = vector.load %arg2[%c0_15, %c0_16, %c0_17] : memref<2x16x64xbf16, #tpu.memory_space<vmem>>, vector<1x16x64xbf16>
    %36 = vector.shape_cast %35 : vector<1x16x64xbf16> to vector<16x64xbf16>
    %37 = vector.shape_cast %34 : vector<16x64xbf16> to vector<1x16x64xbf16>
    tpu.vector_store %arg2[%c0_15, %c0_16, %c0_17], %37 {strides = array<i32>} : memref<2x16x64xbf16, #tpu.memory_space<vmem>>, vector<1x16x64xbf16>,
    %38 = vector.broadcast %20 : vector<16x1xf32> to vector<16x64xf32>
    %39 = arith.subf %6, %38 : vector<16x64xf32>
    %40 = vector.broadcast %27 : vector<16x1xf32> to vector<16x64xf32>
    %41 = arith.mulf %39, %40 : vector<16x64xf32>
    %cst_18 = arith.constant 0.000000e+00 : f32
    %42 = vector.broadcast %cst_18 : f32 to vector<16x64xf32>
    %43 = arith.maximumf %41, %42 : vector<16x64xf32>
    %44 = arith.truncf %43 : vector<16x64xf32> to vector<16x64xbf16>
    %c1_19 = arith.constant 1 : index
    %c0_20 = arith.constant 0 : index
    %c0_21 = arith.constant 0 : index
    %45 = vector.load %arg2[%c1_19, %c0_20, %c0_21] : memref<2x16x64xbf16, #tpu.memory_space<vmem>>, vector<1x16x64xbf16>
    %46 = vector.shape_cast %45 : vector<1x16x64xbf16> to vector<16x64xbf16>
    %47 = vector.shape_cast %44 : vector<16x64xbf16> to vector<1x16x64xbf16>
    tpu.vector_store %arg2[%c1_19, %c0_20, %c0_21], %47 {strides = array<i32>} : memref<2x16x64xbf16, #tpu.memory_space<vmem>>, vector<1x16x64xbf16>,
    return
  }
}

module attributes {stable_mosaic.version = 11 : i64} {
  func.func @_convT_bn_relu_kernel(%arg0: memref<2x256x256xbf16, #tpu.memory_space<vmem>>, %arg1: memref<8x256xbf16, #tpu.memory_space<vmem>>, %arg2: memref<2x8x256xbf16, #tpu.memory_space<vmem>>) attributes {dimension_semantics = [], scalar_prefetch = 0 : i64, scratch_operands = 0 : i64, tpu.core_type = #tpu.core_type<tc>} {
    %c0 = arith.constant 0 : index
    %c0_0 = arith.constant 0 : index
    %0 = vector.load %arg1[%c0, %c0_0] : memref<8x256xbf16, #tpu.memory_space<vmem>>, vector<8x256xbf16>
    %c0_1 = arith.constant 0 : index
    %c0_2 = arith.constant 0 : index
    %c0_3 = arith.constant 0 : index
    %1 = vector.load %arg0[%c0_1, %c0_2, %c0_3] : memref<2x256x256xbf16, #tpu.memory_space<vmem>>, vector<1x256x256xbf16>
    %2 = vector.shape_cast %1 : vector<1x256x256xbf16> to vector<256x256xbf16>
    %cst = arith.constant dense<0.000000e+00> : vector<8x256xf32>
    %3 = tpu.matmul %0, %2, %cst {dimension_numbers = #tpu.dot_dimension_numbers<[1], [0], [0], [1], [0, 0, 1, 1], [], []>} : vector<8x256xbf16>, vector<256x256xbf16>, vector<8x256xf32> -> vector<8x256xf32>
    %c1 = arith.constant 1 : index
    %c0_4 = arith.constant 0 : index
    %c0_5 = arith.constant 0 : index
    %4 = vector.load %arg0[%c1, %c0_4, %c0_5] : memref<2x256x256xbf16, #tpu.memory_space<vmem>>, vector<1x256x256xbf16>
    %5 = vector.shape_cast %4 : vector<1x256x256xbf16> to vector<256x256xbf16>
    %cst_6 = arith.constant dense<0.000000e+00> : vector<8x256xf32>
    %6 = tpu.matmul %0, %5, %cst_6 {dimension_numbers = #tpu.dot_dimension_numbers<[1], [0], [0], [1], [0, 0, 1, 1], [], []>} : vector<8x256xbf16>, vector<256x256xbf16>, vector<8x256xf32> -> vector<8x256xf32>
    %cst_7 = arith.constant dense<0.000000e+00> : vector<8xf32>
    %7 = vector.multi_reduction <add>, %3, %cst_7 [1] : vector<8x256xf32> to vector<8xf32>
    %8 = vector.shape_cast %7 : vector<8xf32> to vector<8x1xf32>
    %9 = arith.mulf %3, %3 : vector<8x256xf32>
    %cst_8 = arith.constant dense<0.000000e+00> : vector<8xf32>
    %10 = vector.multi_reduction <add>, %9, %cst_8 [1] : vector<8x256xf32> to vector<8xf32>
    %11 = vector.shape_cast %10 : vector<8xf32> to vector<8x1xf32>
    %cst_9 = arith.constant dense<0.000000e+00> : vector<8xf32>
    %12 = vector.multi_reduction <add>, %6, %cst_9 [1] : vector<8x256xf32> to vector<8xf32>
    %13 = vector.shape_cast %12 : vector<8xf32> to vector<8x1xf32>
    %14 = arith.addf %8, %13 : vector<8x1xf32>
    %15 = arith.mulf %6, %6 : vector<8x256xf32>
    %cst_10 = arith.constant dense<0.000000e+00> : vector<8xf32>
    %16 = vector.multi_reduction <add>, %15, %cst_10 [1] : vector<8x256xf32> to vector<8xf32>
    %17 = vector.shape_cast %16 : vector<8xf32> to vector<8x1xf32>
    %18 = arith.addf %11, %17 : vector<8x1xf32>
    %cst_11 = arith.constant 0.001953125 : f32
    %19 = vector.broadcast %cst_11 : f32 to vector<8x1xf32>
    %20 = arith.mulf %14, %19 : vector<8x1xf32>
    %cst_12 = arith.constant 0.001953125 : f32
    %21 = vector.broadcast %cst_12 : f32 to vector<8x1xf32>
    %22 = arith.mulf %18, %21 : vector<8x1xf32>
    %23 = arith.mulf %20, %20 : vector<8x1xf32>
    %24 = arith.subf %22, %23 : vector<8x1xf32>
    %cst_13 = arith.constant 9.99999974E-6 : f32
    %25 = vector.broadcast %cst_13 : f32 to vector<8x1xf32>
    %26 = arith.addf %24, %25 : vector<8x1xf32>
    %27 = math.rsqrt %26 : vector<8x1xf32>
    %28 = vector.broadcast %20 : vector<8x1xf32> to vector<8x256xf32>
    %29 = arith.subf %3, %28 : vector<8x256xf32>
    %30 = vector.broadcast %27 : vector<8x1xf32> to vector<8x256xf32>
    %31 = arith.mulf %29, %30 : vector<8x256xf32>
    %cst_14 = arith.constant 0.000000e+00 : f32
    %32 = vector.broadcast %cst_14 : f32 to vector<8x256xf32>
    %33 = arith.maximumf %31, %32 : vector<8x256xf32>
    %34 = arith.truncf %33 : vector<8x256xf32> to vector<8x256xbf16>
    %c0_15 = arith.constant 0 : index
    %c0_16 = arith.constant 0 : index
    %c0_17 = arith.constant 0 : index
    %35 = vector.load %arg2[%c0_15, %c0_16, %c0_17] : memref<2x8x256xbf16, #tpu.memory_space<vmem>>, vector<1x8x256xbf16>
    %36 = vector.shape_cast %35 : vector<1x8x256xbf16> to vector<8x256xbf16>
    %37 = vector.shape_cast %34 : vector<8x256xbf16> to vector<1x8x256xbf16>
    tpu.vector_store %arg2[%c0_15, %c0_16, %c0_17], %37 {strides = array<i32>} : memref<2x8x256xbf16, #tpu.memory_space<vmem>>, vector<1x8x256xbf16>,
    %38 = vector.broadcast %20 : vector<8x1xf32> to vector<8x256xf32>
    %39 = arith.subf %6, %38 : vector<8x256xf32>
    %40 = vector.broadcast %27 : vector<8x1xf32> to vector<8x256xf32>
    %41 = arith.mulf %39, %40 : vector<8x256xf32>
    %cst_18 = arith.constant 0.000000e+00 : f32
    %42 = vector.broadcast %cst_18 : f32 to vector<8x256xf32>
    %43 = arith.maximumf %41, %42 : vector<8x256xf32>
    %44 = arith.truncf %43 : vector<8x256xf32> to vector<8x256xbf16>
    %c1_19 = arith.constant 1 : index
    %c0_20 = arith.constant 0 : index
    %c0_21 = arith.constant 0 : index
    %45 = vector.load %arg2[%c1_19, %c0_20, %c0_21] : memref<2x8x256xbf16, #tpu.memory_space<vmem>>, vector<1x8x256xbf16>
    %46 = vector.shape_cast %45 : vector<1x8x256xbf16> to vector<8x256xbf16>
    %47 = vector.shape_cast %44 : vector<8x256xbf16> to vector<1x8x256xbf16>
    tpu.vector_store %arg2[%c1_19, %c0_20, %c0_21], %47 {strides = array<i32>} : memref<2x8x256xbf16, #tpu.memory_space<vmem>>, vector<1x8x256xbf16>,
    return
  }
}

module attributes {stable_mosaic.version = 11 : i64} {
  func.func @_convT_tanh_kernel(%arg0: i32, %arg1: memref<1x128x784xbf16, #tpu.memory_space<vmem>>, %arg2: memref<3x128xbf16, #tpu.memory_space<vmem>>, %arg3: memref<3x1xf32, #tpu.memory_space<vmem>>, %arg4: memref<1x3x784xf32, #tpu.memory_space<vmem>>) attributes {dimension_semantics = [#tpu.dimension_semantics<parallel>], iteration_bounds = array<i64: 2>, scalar_prefetch = 0 : i64, scratch_operands = 0 : i64, tpu.core_type = #tpu.core_type<tc>, window_params = [{transform_indices = @transform_0, window_bounds = array<i64: 1, 128, 784>}, {pipeline_mode = #tpu.pipeline_mode<synchronous>, transform_indices = @transform_1, window_bounds = array<i64: 3, 128>}, {pipeline_mode = #tpu.pipeline_mode<synchronous>, transform_indices = @transform_2, window_bounds = array<i64: 3, 1>}, {transform_indices = @transform_3, window_bounds = array<i64: 1, 3, 784>}]} {
    %c0 = arith.constant 0 : index
    %c0_0 = arith.constant 0 : index
    %0 = vector.load %arg2[%c0, %c0_0] : memref<3x128xbf16, #tpu.memory_space<vmem>>, vector<3x128xbf16>
    %c0_1 = arith.constant 0 : index
    %c0_2 = arith.constant 0 : index
    %c0_3 = arith.constant 0 : index
    %1 = vector.load %arg1[%c0_1, %c0_2, %c0_3] : memref<1x128x784xbf16, #tpu.memory_space<vmem>>, vector<1x128x784xbf16>
    %2 = vector.shape_cast %1 : vector<1x128x784xbf16> to vector<128x784xbf16>
    %cst = arith.constant dense<0.000000e+00> : vector<3x784xf32>
    %3 = tpu.matmul %0, %2, %cst {dimension_numbers = #tpu.dot_dimension_numbers<[1], [0], [0], [1], [0, 0, 1, 1], [], []>} : vector<3x128xbf16>, vector<128x784xbf16>, vector<3x784xf32> -> vector<3x784xf32>
    %c0_4 = arith.constant 0 : index
    %c0_5 = arith.constant 0 : index
    %4 = vector.load %arg3[%c0_4, %c0_5] : memref<3x1xf32, #tpu.memory_space<vmem>>, vector<3x1xf32>
    %5 = vector.broadcast %4 : vector<3x1xf32> to vector<3x784xf32>
    %6 = arith.addf %3, %5 : vector<3x784xf32>
    %7 = math.tanh %6 : vector<3x784xf32>
    %c0_6 = arith.constant 0 : index
    %c0_7 = arith.constant 0 : index
    %c0_8 = arith.constant 0 : index
    %8 = vector.load %arg4[%c0_6, %c0_7, %c0_8] : memref<1x3x784xf32, #tpu.memory_space<vmem>>, vector<1x3x784xf32>
    %9 = vector.shape_cast %8 : vector<1x3x784xf32> to vector<3x784xf32>
    %10 = vector.shape_cast %7 : vector<3x784xf32> to vector<1x3x784xf32>
    tpu.vector_store %arg4[%c0_6, %c0_7, %c0_8], %10 {strides = array<i32>} : memref<1x3x784xf32, #tpu.memory_space<vmem>>, vector<1x3x784xf32>,
    return
  }
  func.func @transform_0(%arg0: i32) -> (i32, i32, i32) {
    %c0_i32 = arith.constant 0 : i32
    %c0_i32_0 = arith.constant 0 : i32
    %c0_i32_1 = arith.constant 0 : i32
    return %arg0, %c0_i32, %c0_i32_0 : i32, i32, i32
  }
  func.func @transform_1(%arg0: i32) -> (i32, i32) {
    %c0_i32 = arith.constant 0 : i32
    %c0_i32_0 = arith.constant 0 : i32
    %c0_i32_1 = arith.constant 0 : i32
    return %c0_i32, %c0_i32_0 : i32, i32
  }
  func.func @transform_2(%arg0: i32) -> (i32, i32) {
    %c0_i32 = arith.constant 0 : i32
    %c0_i32_0 = arith.constant 0 : i32
    %c0_i32_1 = arith.constant 0 : i32
    return %c0_i32, %c0_i32_0 : i32, i32
  }
  func.func @transform_3(%arg0: i32) -> (i32, i32, i32) {
    %c0_i32 = arith.constant 0 : i32
    %c0_i32_0 = arith.constant 0 : i32
    %c0_i32_1 = arith.constant 0 : i32
    return %arg0, %c0_i32, %c0_i32_0 : i32, i32, i32
  }
}

</mosaic_0001>

<llo_original>
// kernel: conv_generator_forward.4
$region0: #{conv_generator_forward.4}
  #allocation0 [shape = 'u32[]', space=smem, size = 0x4, offset = 0x4, fixed_abs, tag = 'smem constant byte address 0x4 - core index']
  #allocation1 [shape = 'u32[144,128]{1,0:T(1,128)}', space=vmem, size = 0x12000, scoped, tag = 'internal scratch']
  %s0 = inlined_call_operand.vmem [shape: bf16[2,256,16], index: 0, kind: input, shape index: {}]
  %s1 = inlined_call_operand.vmem [shape: bf16[32,256], index: 1, kind: input, shape index: {}]
  %s2 = inlined_call_operand.vmem [shape: bf16[2,32,16], index: 2, kind: output, shape index: {}]
  %s3 = sld [smem:[#allocation0]]
  $region18: #{conv_generator_forward.4} parent=0
    _
  %s5 = ssub.s32 1, %s3
  %s6 = scalar_select 0, %s5, %s3
  // Predicated region
  $region2: #{conv_generator_forward.4} parent=0 // pred_check
    _
  $region3: #{conv_generator_forward.4} parent=0 // pred_check_branch
    %8 = sbr.rel (0) target = $region5
  $region4: #{conv_generator_forward.4} parent=0 // pred_region
    _
  $region5: #{conv_generator_forward.4} parent=0 // pred_fallthru
    _
  // Predicated region
  $region6: #{conv_generator_forward.4} parent=0 // pred_check
    _
  $region7: #{conv_generator_forward.4} parent=0 // pred_check_branch
    %10 = sbr.rel (0) target = $region9
  $region8: #{conv_generator_forward.4} parent=0 // pred_region
    _
  $region9: #{conv_generator_forward.4} parent=0 // pred_fallthru
    _
  %v12 = vld [vmem:[%s1] sm:$0xff]
  %v13 = vld [vmem:[%s1 + $0x8] sm:$0xff]
  %v14 = vld [vmem:[%s1 + $0x10] sm:$0xff]
  %v15 = vld [vmem:[%s1 + $0x18] sm:$0xff]
  %v16 = vld [vmem:[%s0] sm:$0xf]
  %v17 = vld [vmem:[%s0 + $0x4] sm:$0xf]
  %v18 = vld [vmem:[%s0 + $0x8] sm:$0xf]
  %v19 = vld [vmem:[%s0 + $0xc] sm:$0xf]
  %v20 = vld [vmem:[%s0 + $0x10] sm:$0xf]
  %v21 = vld [vmem:[%s0 + $0x14] sm:$0xf]
  %v22 = vld [vmem:[%s0 + $0x18] sm:$0xf]
  %v23 = vld [vmem:[%s0 + $0x1c] sm:$0xf]
  %v24 = vld [vmem:[%s0 + $0x20] sm:$0xf]
  %v25 = vld [vmem:[%s0 + $0x24] sm:$0xf]
  %v26 = vld [vmem:[%s0 + $0x28] sm:$0xf]
  %v27 = vld [vmem:[%s0 + $0x2c] sm:$0xf]
  %v28 = vld [vmem:[%s0 + $0x30] sm:$0xf]
  %v29 = vld [vmem:[%s0 + $0x34] sm:$0xf]
  %v30 = vld [vmem:[%s0 + $0x38] sm:$0xf]
  %v31 = vld [vmem:[%s0 + $0x3c] sm:$0xf]
  %v32 = vld [vmem:[%s0 + $0x40] sm:$0xf]
  %v33 = vld [vmem:[%s0 + $0x44] sm:$0xf]
  %v34 = vld [vmem:[%s0 + $0x48] sm:$0xf]
  %v35 = vld [vmem:[%s0 + $0x4c] sm:$0xf]
  %v36 = vld [vmem:[%s0 + $0x50] sm:$0xf]
  %v37 = vld [vmem:[%s0 + $0x54] sm:$0xf]
  %v38 = vld [vmem:[%s0 + $0x58] sm:$0xf]
  %v39 = vld [vmem:[%s0 + $0x5c] sm:$0xf]
  %v40 = vld [vmem:[%s0 + $0x60] sm:$0xf]
  %v41 = vld [vmem:[%s0 + $0x64] sm:$0xf]
  %v42 = vld [vmem:[%s0 + $0x68] sm:$0xf]
  %v43 = vld [vmem:[%s0 + $0x6c] sm:$0xf]
  %v44 = vld [vmem:[%s0 + $0x70] sm:$0xf]
  %v45 = vld [vmem:[%s0 + $0x74] sm:$0xf]
  %v46 = vld [vmem:[%s0 + $0x78] sm:$0xf]
  %v47 = vld [vmem:[%s0 + $0x7c] sm:$0xf]
  %v52 = vunpack.c.l.b16 %v12
  %v53 = vunpack.c.h.b16 %v12
  %v54 = vunpack.c.l.b16 %v13
  %v55 = vunpack.c.h.b16 %v13
  %v56 = vunpack.c.l.b16 %v14
  %v57 = vunpack.c.h.b16 %v14
  %v58 = vunpack.c.l.b16 %v15
  %v59 = vunpack.c.h.b16 %v15
  %v60 = vpack.c.b16 %v54, %v52
  %v61 = vpack.c.b16 %v55, %v53
  %v62 = vpack.c.b16 %v58, %v56
  %v63 = vpack.c.b16 %v59, %v57
  %v100 = vunpack.c.l.b16 %v16
  %v101 = vunpack.c.l.b16 %v17
  %v102 = vunpack.c.l.b16 %v18
  %v103 = vunpack.c.l.b16 %v19
  %v104 = vunpack.c.l.b16 %v20
  %v105 = vunpack.c.l.b16 %v21
  %v106 = vunpack.c.l.b16 %v22
  %v107 = vunpack.c.l.b16 %v23
  %v108 = vunpack.c.l.b16 %v24
  %v109 = vunpack.c.l.b16 %v25
  %v110 = vunpack.c.l.b16 %v26
  %v111 = vunpack.c.l.b16 %v27
  %v112 = vunpack.c.l.b16 %v28
  %v113 = vunpack.c.l.b16 %v29
  %v114 = vunpack.c.l.b16 %v30
  %v115 = vunpack.c.l.b16 %v31
  %v116 = vunpack.c.l.b16 %v32
  %v117 = vunpack.c.l.b16 %v33
  %v118 = vunpack.c.l.b16 %v34
  %v119 = vunpack.c.l.b16 %v35
  %v120 = vunpack.c.l.b16 %v36
  %v121 = vunpack.c.l.b16 %v37
  %v122 = vunpack.c.l.b16 %v38
  %v123 = vunpack.c.l.b16 %v39
  %v124 = vunpack.c.l.b16 %v40
  %v125 = vunpack.c.l.b16 %v41
  %v126 = vunpack.c.l.b16 %v42
  %v127 = vunpack.c.l.b16 %v43
  %v128 = vunpack.c.l.b16 %v44
  %v129 = vunpack.c.l.b16 %v45
  %v130 = vunpack.c.l.b16 %v46
  %v131 = vunpack.c.l.b16 %v47
  %v132 = vpack.c.b16 %v101, %v100
  %v133 = vpack.c.b16 %v103, %v102
  %v134 = vpack.c.b16 %v105, %v104
  %v135 = vpack.c.b16 %v107, %v106
  %v136 = vpack.c.b16 %v109, %v108
  %v137 = vpack.c.b16 %v111, %v110
  %v138 = vpack.c.b16 %v113, %v112
  %v139 = vpack.c.b16 %v115, %v114
  %v140 = vpack.c.b16 %v117, %v116
  %v141 = vpack.c.b16 %v119, %v118
  %v142 = vpack.c.b16 %v121, %v120
  %v143 = vpack.c.b16 %v123, %v122
  %v144 = vpack.c.b16 %v125, %v124
  %v145 = vpack.c.b16 %v127, %v126
  %v146 = vpack.c.b16 %v129, %v128
  %v147 = vpack.c.b16 %v131, %v130
  %164 = vmatprep.subr.bf16.mxu0 0
  %165 = vmatpush1.bf16.msra.mxu0 %v132
  %166 = vmatprep.subr.bf16.mxu0 0
  %167 = vmatpush1.bf16.msra.mxu0 %v133
  %168 = vmatprep.subr.bf16.mxu0 0
  %169 = vmatpush1.bf16.msra.mxu0 %v134
  %170 = vmatprep.subr.bf16.mxu0 0
  %171 = vmatpush1.bf16.msra.mxu0 %v135
  %172 = vmatprep.subr.bf16.mxu0 0
  %173 = vmatpush1.bf16.msra.mxu0 %v136
  %174 = vmatprep.subr.bf16.mxu0 0
  %175 = vmatpush1.bf16.msra.mxu0 %v137
  %176 = vmatprep.subr.bf16.mxu0 0
  %177 = vmatpush1.bf16.msra.mxu0 %v138
  %178 = vmatprep.subr.bf16.mxu0 0
  %179 = vmatpush1.bf16.msra.mxu0 %v139
  %180 = vmatprep.subr.bf16.mxu0 0
  %181 = vmatpush1.bf16.msra.mxu0 %v140
  %182 = vmatprep.subr.bf16.mxu0 0
  %183 = vmatpush1.bf16.msra.mxu0 %v141
  %184 = vmatprep.subr.bf16.mxu0 0
  %185 = vmatpush1.bf16.msra.mxu0 %v142
  %186 = vmatprep.subr.bf16.mxu0 0
  %187 = vmatpush1.bf16.msra.mxu0 %v143
  %188 = vmatprep.subr.bf16.mxu0 0
  %189 = vmatpush1.bf16.msra.mxu0 %v144
  %190 = vmatprep.subr.bf16.mxu0 0
  %191 = vmatpush1.bf16.msra.mxu0 %v145
  %192 = vmatprep.subr.bf16.mxu0 0
  %193 = vmatpush1.bf16.msra.mxu0 %v146
  %194 = vmatprep.subr.bf16.mxu0 0
  %195 = vmatpush1.bf16.msra.mxu0 %v147
  %196 = vmatprep.mubr.bf16.mxu0 %v61
  %197 = vmatmul.mubr.bf16.gmra.mrb[0].mxu0 %v60
  %v198 = vpop.f32.mrb[0].mxu0
  %v199 = vadd.f32 0.0, %v198
  %v200 = vpop.f32.mrb[0].mxu0
  %v201 = vpop.f32.mrb[0].mxu0
  %v202 = vadd.f32 0.0, %v201
  %v203 = vpop.f32.mrb[0].mxu0
  %204 = vmatprep.mubr.bf16.mxu0 %v63
  %205 = vmatmul.mubr.bf16.gmra.mrb[0].mxu0 %v62
  %v206 = vpop.f32.mrb[0].mxu0
  %v207 = vadd.f32 0.0, %v206
  %v208 = vpop.f32.mrb[0].mxu0
  %v209 = vpop.f32.mrb[0].mxu0
  %v210 = vadd.f32 0.0, %v209
  %v211 = vpop.f32.mrb[0].mxu0
  %212 = vdwg.mxu0
  %s213 = scalar_lea.vmem %s0, 128
  %v214 = vld [vmem:[%s213] sm:$0xf]
  %v215 = vld [vmem:[%s213 + $0x4] sm:$0xf]
  %v216 = vld [vmem:[%s213 + $0x8] sm:$0xf]
  %v217 = vld [vmem:[%s213 + $0xc] sm:$0xf]
  %v218 = vld [vmem:[%s213 + $0x10] sm:$0xf]
  %v219 = vld [vmem:[%s213 + $0x14] sm:$0xf]
  %v220 = vld [vmem:[%s213 + $0x18] sm:$0xf]
  %v221 = vld [vmem:[%s213 + $0x1c] sm:$0xf]
  %v222 = vld [vmem:[%s213 + $0x20] sm:$0xf]
  %v223 = vld [vmem:[%s213 + $0x24] sm:$0xf]
  %v224 = vld [vmem:[%s213 + $0x28] sm:$0xf]
  %v225 = vld [vmem:[%s213 + $0x2c] sm:$0xf]
  %v226 = vld [vmem:[%s213 + $0x30] sm:$0xf]
  %v227 = vld [vmem:[%s213 + $0x34] sm:$0xf]
  %v228 = vld [vmem:[%s213 + $0x38] sm:$0xf]
  %v229 = vld [vmem:[%s213 + $0x3c] sm:$0xf]
  %v230 = vld [vmem:[%s213 + $0x40] sm:$0xf]
  %v231 = vld [vmem:[%s213 + $0x44] sm:$0xf]
  %v232 = vld [vmem:[%s213 + $0x48] sm:$0xf]
  %v233 = vld [vmem:[%s213 + $0x4c] sm:$0xf]
  %v234 = vld [vmem:[%s213 + $0x50] sm:$0xf]
  %v235 = vld [vmem:[%s213 + $0x54] sm:$0xf]
  %v236 = vld [vmem:[%s213 + $0x58] sm:$0xf]
  %v237 = vld [vmem:[%s213 + $0x5c] sm:$0xf]
  %v238 = vld [vmem:[%s213 + $0x60] sm:$0xf]
  %v239 = vld [vmem:[%s213 + $0x64] sm:$0xf]
  %v240 = vld [vmem:[%s213 + $0x68] sm:$0xf]
  %v241 = vld [vmem:[%s213 + $0x6c] sm:$0xf]
  %v242 = vld [vmem:[%s213 + $0x70] sm:$0xf]
  %v243 = vld [vmem:[%s213 + $0x74] sm:$0xf]
  %v244 = vld [vmem:[%s213 + $0x78] sm:$0xf]
  %v245 = vld [vmem:[%s213 + $0x7c] sm:$0xf]
  %v278 = vunpack.c.l.b16 %v214
  %v279 = vunpack.c.l.b16 %v215
  %v280 = vunpack.c.l.b16 %v216
  %v281 = vunpack.c.l.b16 %v217
  %v282 = vunpack.c.l.b16 %v218
  %v283 = vunpack.c.l.b16 %v219
  %v284 = vunpack.c.l.b16 %v220
  %v285 = vunpack.c.l.b16 %v221
  %v286 = vunpack.c.l.b16 %v222
  %v287 = vunpack.c.l.b16 %v223
  %v288 = vunpack.c.l.b16 %v224
  %v289 = vunpack.c.l.b16 %v225
  %v290 = vunpack.c.l.b16 %v226
  %v291 = vunpack.c.l.b16 %v227
  %v292 = vunpack.c.l.b16 %v228
  %v293 = vunpack.c.l.b16 %v229
  %v294 = vunpack.c.l.b16 %v230
  %v295 = vunpack.c.l.b16 %v231
  %v296 = vunpack.c.l.b16 %v232
  %v297 = vunpack.c.l.b16 %v233
  %v298 = vunpack.c.l.b16 %v234
  %v299 = vunpack.c.l.b16 %v235
  %v300 = vunpack.c.l.b16 %v236
  %v301 = vunpack.c.l.b16 %v237
  %v302 = vunpack.c.l.b16 %v238
  %v303 = vunpack.c.l.b16 %v239
  %v304 = vunpack.c.l.b16 %v240
  %v305 = vunpack.c.l.b16 %v241
  %v306 = vunpack.c.l.b16 %v242
  %v307 = vunpack.c.l.b16 %v243
  %v308 = vunpack.c.l.b16 %v244
  %v309 = vunpack.c.l.b16 %v245
  %v310 = vpack.c.b16 %v279, %v278
  %v311 = vpack.c.b16 %v281, %v280
  %v312 = vpack.c.b16 %v283, %v282
  %v313 = vpack.c.b16 %v285, %v284
  %v314 = vpack.c.b16 %v287, %v286
  %v315 = vpack.c.b16 %v289, %v288
  %v316 = vpack.c.b16 %v291, %v290
  %v317 = vpack.c.b16 %v293, %v292
  %v318 = vpack.c.b16 %v295, %v294
  %v319 = vpack.c.b16 %v297, %v296
  %v320 = vpack.c.b16 %v299, %v298
  %v321 = vpack.c.b16 %v301, %v300
  %v322 = vpack.c.b16 %v303, %v302
  %v323 = vpack.c.b16 %v305, %v304
  %v324 = vpack.c.b16 %v307, %v306
  %v325 = vpack.c.b16 %v309, %v308
  %342 = vmatprep.subr.bf16.mxu0 0
  %343 = vmatpush1.bf16.msra.mxu0 %v310
  %344 = vmatprep.subr.bf16.mxu0 0
  %345 = vmatpush1.bf16.msra.mxu0 %v311
  %346 = vmatprep.subr.bf16.mxu0 0
  %347 = vmatpush1.bf16.msra.mxu0 %v312
  %348 = vmatprep.subr.bf16.mxu0 0
  %349 = vmatpush1.bf16.msra.mxu0 %v313
  %350 = vmatprep.subr.bf16.mxu0 0
  %351 = vmatpush1.bf16.msra.mxu0 %v314
  %352 = vmatprep.subr.bf16.mxu0 0
  %353 = vmatpush1.bf16.msra.mxu0 %v315
  %354 = vmatprep.subr.bf16.mxu0 0
  %355 = vmatpush1.bf16.msra.mxu0 %v316
  %356 = vmatprep.subr.bf16.mxu0 0
  %357 = vmatpush1.bf16.msra.mxu0 %v317
  %358 = vmatprep.subr.bf16.mxu0 0
  %359 = vmatpush1.bf16.msra.mxu0 %v318
  %360 = vmatprep.subr.bf16.mxu0 0
  %361 = vmatpush1.bf16.msra.mxu0 %v319
  %362 = vmatprep.subr.bf16.mxu0 0
  %363 = vmatpush1.bf16.msra.mxu0 %v320
  %364 = vmatprep.subr.bf16.mxu0 0
  %365 = vmatpush1.bf16.msra.mxu0 %v321
  %366 = vmatprep.subr.bf16.mxu0 0
  %367 = vmatpush1.bf16.msra.mxu0 %v322
  %368 = vmatprep.subr.bf16.mxu0 0
  %369 = vmatpush1.bf16.msra.mxu0 %v323
  %370 = vmatprep.subr.bf16.mxu0 0
  %371 = vmatpush1.bf16.msra.mxu0 %v324
  %372 = vmatprep.subr.bf16.mxu0 0
  %373 = vmatpush1.bf16.msra.mxu0 %v325
  %374 = vmatprep.mubr.bf16.mxu0 %v61
  %375 = vmatmul.mubr.bf16.gmra.mrb[0].mxu0 %v60
  %v376 = vpop.f32.mrb[0].mxu0
  %v377 = vadd.f32 0.0, %v376
  %v378 = vpop.f32.mrb[0].mxu0
  %v379 = vpop.f32.mrb[0].mxu0
  %v380 = vadd.f32 0.0, %v379
  %v381 = vpop.f32.mrb[0].mxu0
  %382 = vmatprep.mubr.bf16.mxu0 %v63
  %383 = vmatmul.mubr.bf16.gmra.mrb[0].mxu0 %v62
  %v384 = vpop.f32.mrb[0].mxu0
  %v385 = vadd.f32 0.0, %v384
  %v386 = vpop.f32.mrb[0].mxu0
  %v387 = vpop.f32.mrb[0].mxu0
  %v388 = vadd.f32 0.0, %v387
  %v389 = vpop.f32.mrb[0].mxu0
  %390 = vdwg.mxu0
  %vm391 = vcmask 130048
  %v392 = vsel %vm391, %v199, 0.0
  %393 = vadd.xlane.f32.xlu0 %v392
  %v394 = vpop.xlane.xlu0 %393
  %v395 = vsel %vm391, %v202, 0.0
  %396 = vadd.xlane.f32.xlu0 %v395
  %v397 = vpop.xlane.xlu0 %396
  %v398 = vsel %vm391, %v207, 0.0
  %399 = vadd.xlane.f32.xlu0 %v398
  %v400 = vpop.xlane.xlu0 %399
  %v401 = vsel %vm391, %v210, 0.0
  %402 = vadd.xlane.f32.xlu0 %v401
  %v403 = vpop.xlane.xlu0 %402
  %v404 = vmul.f32 %v199, %v199
  %v405 = vmul.f32 %v202, %v202
  %v406 = vmul.f32 %v207, %v207
  %v407 = vmul.f32 %v210, %v210
  %v408 = vsel %vm391, %v404, 0.0
  %409 = vadd.xlane.f32.xlu0 %v408
  %v410 = vpop.xlane.xlu0 %409
  %v411 = vsel %vm391, %v405, 0.0
  %412 = vadd.xlane.f32.xlu0 %v411
  %v413 = vpop.xlane.xlu0 %412
  %v414 = vsel %vm391, %v406, 0.0
  %415 = vadd.xlane.f32.xlu0 %v414
  %v416 = vpop.xlane.xlu0 %415
  %v417 = vsel %vm391, %v407, 0.0
  %418 = vadd.xlane.f32.xlu0 %v417
  %v419 = vpop.xlane.xlu0 %418
  %v420 = vsel %vm391, %v377, 0.0
  %421 = vadd.xlane.f32.xlu0 %v420
  %v422 = vpop.xlane.xlu0 %421
  %v423 = vsel %vm391, %v380, 0.0
  %424 = vadd.xlane.f32.xlu0 %v423
  %v425 = vpop.xlane.xlu0 %424
  %v426 = vsel %vm391, %v385, 0.0
  %427 = vadd.xlane.f32.xlu0 %v426
  %v428 = vpop.xlane.xlu0 %427
  %v429 = vsel %vm391, %v388, 0.0
  %430 = vadd.xlane.f32.xlu0 %v429
  %v431 = vpop.xlane.xlu0 %430
  %v432 = vadd.f32 %v394, %v422
  %v433 = vadd.f32 %v397, %v425
  %v434 = vadd.f32 %v400, %v428
  %v435 = vadd.f32 %v403, %v431
  %v436 = vmul.f32 %v377, %v377
  %v437 = vmul.f32 %v380, %v380
  %v438 = vmul.f32 %v385, %v385
  %v439 = vmul.f32 %v388, %v388
  %v440 = vsel %vm391, %v436, 0.0
  %441 = vadd.xlane.f32.xlu0 %v440
  %v442 = vpop.xlane.xlu0 %441
  %v443 = vsel %vm391, %v437, 0.0
  %444 = vadd.xlane.f32.xlu0 %v443
  %v445 = vpop.xlane.xlu0 %444
  %v446 = vsel %vm391, %v438, 0.0
  %447 = vadd.xlane.f32.xlu0 %v446
  %v448 = vpop.xlane.xlu0 %447
  %v449 = vsel %vm391, %v439, 0.0
  %450 = vadd.xlane.f32.xlu0 %v449
  %v451 = vpop.xlane.xlu0 %450
  %v452 = vadd.f32 %v410, %v442
  %v453 = vadd.f32 %v413, %v445
  %v454 = vadd.f32 %v416, %v448
  %v455 = vadd.f32 %v419, %v451
  %v456 = vmul.f32 %v432, 0.03125
  %v457 = vmul.f32 %v433, 0.03125
  %v458 = vmul.f32 %v434, 0.03125
  %v459 = vmul.f32 %v435, 0.03125
  %v460 = vmul.f32 %v452, 0.03125
  %v461 = vmul.f32 %v453, 0.03125
  %v462 = vmul.f32 %v454, 0.03125
  %v463 = vmul.f32 %v455, 0.03125
  %v464 = vmul.f32 %v456, %v456
  %v465 = vmul.f32 %v457, %v457
  %v466 = vmul.f32 %v458, %v458
  %v467 = vmul.f32 %v459, %v459
  %v468 = vsub.f32 %v460, %v464
  %v469 = vsub.f32 %v461, %v465
  %v470 = vsub.f32 %v462, %v466
  %v471 = vsub.f32 %v463, %v467
  %v472 = vadd.f32 %v468, 1e-05
  %v473 = vadd.f32 %v469, 1e-05
  %v474 = vadd.f32 %v470, 1e-05
  %v475 = vadd.f32 %v471, 1e-05
  %v476 = vrsqrt.pop %v472
  %v477 = vrsqrt.pop %v473
  %v478 = vrsqrt.pop %v474
  %v479 = vrsqrt.pop %v475
  %v480 = vsub.f32 %v199, %v456
  %v481 = vsub.f32 %v202, %v457
  %v482 = vsub.f32 %v207, %v458
  %v483 = vsub.f32 %v210, %v459
  %v484 = vmul.f32 %v480, %v476
  %v485 = vmul.f32 %v481, %v477
  %v486 = vmul.f32 %v482, %v478
  %v487 = vmul.f32 %v483, %v479
  %v488 = vmax.f32 %v484, 0.0
  %v489 = vmax.f32 %v485, 0.0
  %v490 = vmax.f32 %v486, 0.0
  %v491 = vmax.f32 %v487, 0.0
  %v492 = vpack.c.bf16 %v489, %v488
  %v493 = vpack.c.bf16 %v491, %v490
  %v496 = vunpack.c.l.b16 %v492
  %v497 = vunpack.c.h.b16 %v492
  %v498 = vunpack.c.l.b16 %v493
  %v499 = vunpack.c.h.b16 %v493
  %v500 = vpack.c.b16 %v496, %v496
  %v501 = vpack.c.b16 %v497, %v497
  %v502 = vpack.c.b16 %v498, %v498
  %v503 = vpack.c.b16 %v499, %v499
  %vm508 = vcmask 125952
  %509 = vst.msk [vmem:[%s2] sm:$0xf] %vm508, %v500
  %510 = vst.msk [vmem:[%s2 + $0x4] sm:$0xf] %vm508, %v501
  %511 = vst.msk [vmem:[%s2 + $0x8] sm:$0xf] %vm508, %v502
  %512 = vst.msk [vmem:[%s2 + $0xc] sm:$0xf] %vm508, %v503
  %v513 = vsub.f32 %v377, %v456
  %v514 = vsub.f32 %v380, %v457
  %v515 = vsub.f32 %v385, %v458
  %v516 = vsub.f32 %v388, %v459
  %v517 = vmul.f32 %v513, %v476
  %v518 = vmul.f32 %v514, %v477
  %v519 = vmul.f32 %v515, %v478
  %v520 = vmul.f32 %v516, %v479
  %v521 = vmax.f32 %v517, 0.0
  %v522 = vmax.f32 %v518, 0.0
  %v523 = vmax.f32 %v519, 0.0
  %v524 = vmax.f32 %v520, 0.0
  %v525 = vpack.c.bf16 %v522, %v521
  %v526 = vpack.c.bf16 %v524, %v523
  %v529 = vunpack.c.l.b16 %v525
  %v530 = vunpack.c.h.b16 %v525
  %v531 = vunpack.c.l.b16 %v526
  %v532 = vunpack.c.h.b16 %v526
  %v533 = vpack.c.b16 %v529, %v529
  %v534 = vpack.c.b16 %v530, %v530
  %v535 = vpack.c.b16 %v531, %v531
  %v536 = vpack.c.b16 %v532, %v532
  %s541 = scalar_lea.vmem %s2, 16
  %542 = vst.msk [vmem:[%s541] sm:$0xf] %vm508, %v533
  %543 = vst.msk [vmem:[%s541 + $0x4] sm:$0xf] %vm508, %v534
  %544 = vst.msk [vmem:[%s541 + $0x8] sm:$0xf] %vm508, %v535
  %545 = vst.msk [vmem:[%s541 + $0xc] sm:$0xf] %vm508, %v536
  // Predicated region
  $region10: #{conv_generator_forward.4} parent=0 // pred_check
    _
  $region11: #{conv_generator_forward.4} parent=0 // pred_check_branch
    %547 = sbr.rel (0) target = $region13
  $region12: #{conv_generator_forward.4} parent=0 // pred_region
    _
  $region13: #{conv_generator_forward.4} parent=0 // pred_fallthru
    _
  // Predicated region
  $region14: #{conv_generator_forward.4} parent=0 // pred_check
    _
  $region15: #{conv_generator_forward.4} parent=0 // pred_check_branch
    %549 = sbr.rel (0) target = $region17
  $region16: #{conv_generator_forward.4} parent=0 // pred_region
    _
  $region17: #{conv_generator_forward.4} parent=0 // pred_fallthru
    _

// kernel: conv_generator_forward.5
$region0: #{conv_generator_forward.5}
  #allocation0 [shape = 'u32[]', space=smem, size = 0x4, offset = 0x4, fixed_abs, tag = 'smem constant byte address 0x4 - core index']
  #allocation1 [shape = 'u32[144,128]{1,0:T(1,128)}', space=vmem, size = 0x12000, scoped, tag = 'internal scratch']
  %s0 = inlined_call_operand.vmem [shape: bf16[2,512,64], index: 0, kind: input, shape index: {}]
  %s1 = inlined_call_operand.vmem [shape: bf16[16,512], index: 1, kind: input, shape index: {}]
  %s2 = inlined_call_operand.vmem [shape: bf16[2,16,64], index: 2, kind: output, shape index: {}]
  %s3 = sld [smem:[#allocation0]]
  $region18: #{conv_generator_forward.5} parent=0
    _
  %s5 = ssub.s32 1, %s3
  %s6 = scalar_select 0, %s5, %s3
  // Predicated region
  $region2: #{conv_generator_forward.5} parent=0 // pred_check
    _
  $region3: #{conv_generator_forward.5} parent=0 // pred_check_branch
    %8 = sbr.rel (0) target = $region5
  $region4: #{conv_generator_forward.5} parent=0 // pred_region
    _
  $region5: #{conv_generator_forward.5} parent=0 // pred_fallthru
    _
  // Predicated region
  $region6: #{conv_generator_forward.5} parent=0 // pred_check
    _
  $region7: #{conv_generator_forward.5} parent=0 // pred_check_branch
    %10 = sbr.rel (0) target = $region9
  $region8: #{conv_generator_forward.5} parent=0 // pred_region
    _
  $region9: #{conv_generator_forward.5} parent=0 // pred_fallthru
    _
  %v12 = vld [vmem:[%s1] sm:$0xff]
  %v13 = vld [vmem:[%s1 + $0x8] sm:$0xff]
  %v14 = vld [vmem:[%s1 + $0x10] sm:$0xff]
  %v15 = vld [vmem:[%s1 + $0x18] sm:$0xff]
  %v16 = vld [vmem:[%s0] sm:$0xf]
  %v17 = vld [vmem:[%s0 + $0x4] sm:$0xf]
  %v18 = vld [vmem:[%s0 + $0x8] sm:$0xf]
  %v19 = vld [vmem:[%s0 + $0xc] sm:$0xf]
  %v20 = vld [vmem:[%s0 + $0x10] sm:$0xf]
  %v21 = vld [vmem:[%s0 + $0x14] sm:$0xf]
  %v22 = vld [vmem:[%s0 + $0x18] sm:$0xf]
  %v23 = vld [vmem:[%s0 + $0x1c] sm:$0xf]
  %v24 = vld [vmem:[%s0 + $0x20] sm:$0xf]
  %v25 = vld [vmem:[%s0 + $0x24] sm:$0xf]
  %v26 = vld [vmem:[%s0 + $0x28] sm:$0xf]
  %v27 = vld [vmem:[%s0 + $0x2c] sm:$0xf]
  %v28 = vld [vmem:[%s0 + $0x30] sm:$0xf]
  %v29 = vld [vmem:[%s0 + $0x34] sm:$0xf]
  %v30 = vld [vmem:[%s0 + $0x38] sm:$0xf]
  %v31 = vld [vmem:[%s0 + $0x3c] sm:$0xf]
  %v32 = vld [vmem:[%s0 + $0x40] sm:$0xf]
  %v33 = vld [vmem:[%s0 + $0x44] sm:$0xf]
  %v34 = vld [vmem:[%s0 + $0x48] sm:$0xf]
  %v35 = vld [vmem:[%s0 + $0x4c] sm:$0xf]
  %v36 = vld [vmem:[%s0 + $0x50] sm:$0xf]
  %v37 = vld [vmem:[%s0 + $0x54] sm:$0xf]
  %v38 = vld [vmem:[%s0 + $0x58] sm:$0xf]
  %v39 = vld [vmem:[%s0 + $0x5c] sm:$0xf]
  %v40 = vld [vmem:[%s0 + $0x60] sm:$0xf]
  %v41 = vld [vmem:[%s0 + $0x64] sm:$0xf]
  %v42 = vld [vmem:[%s0 + $0x68] sm:$0xf]
  %v43 = vld [vmem:[%s0 + $0x6c] sm:$0xf]
  %v44 = vld [vmem:[%s0 + $0x70] sm:$0xf]
  %v45 = vld [vmem:[%s0 + $0x74] sm:$0xf]
  %v46 = vld [vmem:[%s0 + $0x78] sm:$0xf]
  %v47 = vld [vmem:[%s0 + $0x7c] sm:$0xf]
  %v48 = vld [vmem:[%s0 + $0x80] sm:$0xf]
  %v49 = vld [vmem:[%s0 + $0x84] sm:$0xf]
  %v50 = vld [vmem:[%s0 + $0x88] sm:$0xf]
  %v51 = vld [vmem:[%s0 + $0x8c] sm:$0xf]
  %v52 = vld [vmem:[%s0 + $0x90] sm:$0xf]
  %v53 = vld [vmem:[%s0 + $0x94] sm:$0xf]
  %v54 = vld [vmem:[%s0 + $0x98] sm:$0xf]
  %v55 = vld [vmem:[%s0 + $0x9c] sm:$0xf]
  %v56 = vld [vmem:[%s0 + $0xa0] sm:$0xf]
  %v57 = vld [vmem:[%s0 + $0xa4] sm:$0xf]
  %v58 = vld [vmem:[%s0 + $0xa8] sm:$0xf]
  %v59 = vld [vmem:[%s0 + $0xac] sm:$0xf]
  %v60 = vld [vmem:[%s0 + $0xb0] sm:$0xf]
  %v61 = vld [vmem:[%s0 + $0xb4] sm:$0xf]
  %v62 = vld [vmem:[%s0 + $0xb8] sm:$0xf]
  %v63 = vld [vmem:[%s0 + $0xbc] sm:$0xf]
  %v64 = vld [vmem:[%s0 + $0xc0] sm:$0xf]
  %v65 = vld [vmem:[%s0 + $0xc4] sm:$0xf]
  %v66 = vld [vmem:[%s0 + $0xc8] sm:$0xf]
  %v67 = vld [vmem:[%s0 + $0xcc] sm:$0xf]
  %v68 = vld [vmem:[%s0 + $0xd0] sm:$0xf]
  %v69 = vld [vmem:[%s0 + $0xd4] sm:$0xf]
  %v70 = vld [vmem:[%s0 + $0xd8] sm:$0xf]
  %v71 = vld [vmem:[%s0 + $0xdc] sm:$0xf]
  %v72 = vld [vmem:[%s0 + $0xe0] sm:$0xf]
  %v73 = vld [vmem:[%s0 + $0xe4] sm:$0xf]
  %v74 = vld [vmem:[%s0 + $0xe8] sm:$0xf]
  %v75 = vld [vmem:[%s0 + $0xec] sm:$0xf]
  %v76 = vld [vmem:[%s0 + $0xf0] sm:$0xf]
  %v77 = vld [vmem:[%s0 + $0xf4] sm:$0xf]
  %v78 = vld [vmem:[%s0 + $0xf8] sm:$0xf]
  %v79 = vld [vmem:[%s0 + $0xfc] sm:$0xf]
  %v84 = vunpack.c.l.b16 %v12
  %v85 = vunpack.c.h.b16 %v12
  %v86 = vunpack.c.l.b16 %v13
  %v87 = vunpack.c.h.b16 %v13
  %v88 = vunpack.c.l.b16 %v14
  %v89 = vunpack.c.h.b16 %v14
  %v90 = vunpack.c.l.b16 %v15
  %v91 = vunpack.c.h.b16 %v15
  %v92 = vpack.c.b16 %v88, %v84
  %v93 = vpack.c.b16 %v89, %v85
  %v94 = vpack.c.b16 %v90, %v86
  %v95 = vpack.c.b16 %v91, %v87
  %v164 = vunpack.c.l.b16 %v16
  %v165 = vunpack.c.l.b16 %v17
  %v166 = vunpack.c.l.b16 %v18
  %v167 = vunpack.c.l.b16 %v19
  %v168 = vunpack.c.l.b16 %v20
  %v169 = vunpack.c.l.b16 %v21
  %v170 = vunpack.c.l.b16 %v22
  %v171 = vunpack.c.l.b16 %v23
  %v172 = vunpack.c.l.b16 %v24
  %v173 = vunpack.c.l.b16 %v25
  %v174 = vunpack.c.l.b16 %v26
  %v175 = vunpack.c.l.b16 %v27
  %v176 = vunpack.c.l.b16 %v28
  %v177 = vunpack.c.l.b16 %v29
  %v178 = vunpack.c.l.b16 %v30
  %v179 = vunpack.c.l.b16 %v31
  %v180 = vunpack.c.l.b16 %v32
  %v181 = vunpack.c.l.b16 %v33
  %v182 = vunpack.c.l.b16 %v34
  %v183 = vunpack.c.l.b16 %v35
  %v184 = vunpack.c.l.b16 %v36
  %v185 = vunpack.c.l.b16 %v37
  %v186 = vunpack.c.l.b16 %v38
  %v187 = vunpack.c.l.b16 %v39
  %v188 = vunpack.c.l.b16 %v40
  %v189 = vunpack.c.l.b16 %v41
  %v190 = vunpack.c.l.b16 %v42
  %v191 = vunpack.c.l.b16 %v43
  %v192 = vunpack.c.l.b16 %v44
  %v193 = vunpack.c.l.b16 %v45
  %v194 = vunpack.c.l.b16 %v46
  %v195 = vunpack.c.l.b16 %v47
  %v196 = vunpack.c.l.b16 %v48
  %v197 = vunpack.c.l.b16 %v49
  %v198 = vunpack.c.l.b16 %v50
  %v199 = vunpack.c.l.b16 %v51
  %v200 = vunpack.c.l.b16 %v52
  %v201 = vunpack.c.l.b16 %v53
  %v202 = vunpack.c.l.b16 %v54
  %v203 = vunpack.c.l.b16 %v55
  %v204 = vunpack.c.l.b16 %v56
  %v205 = vunpack.c.l.b16 %v57
  %v206 = vunpack.c.l.b16 %v58
  %v207 = vunpack.c.l.b16 %v59
  %v208 = vunpack.c.l.b16 %v60
  %v209 = vunpack.c.l.b16 %v61
  %v210 = vunpack.c.l.b16 %v62
  %v211 = vunpack.c.l.b16 %v63
  %v212 = vunpack.c.l.b16 %v64
  %v213 = vunpack.c.l.b16 %v65
  %v214 = vunpack.c.l.b16 %v66
  %v215 = vunpack.c.l.b16 %v67
  %v216 = vunpack.c.l.b16 %v68
  %v217 = vunpack.c.l.b16 %v69
  %v218 = vunpack.c.l.b16 %v70
  %v219 = vunpack.c.l.b16 %v71
  %v220 = vunpack.c.l.b16 %v72
  %v221 = vunpack.c.l.b16 %v73
  %v222 = vunpack.c.l.b16 %v74
  %v223 = vunpack.c.l.b16 %v75
  %v224 = vunpack.c.l.b16 %v76
  %v225 = vunpack.c.l.b16 %v77
  %v226 = vunpack.c.l.b16 %v78
  %v227 = vunpack.c.l.b16 %v79
  %v228 = vpack.c.b16 %v165, %v164
  %v229 = vpack.c.b16 %v167, %v166
  %v230 = vpack.c.b16 %v169, %v168
  %v231 = vpack.c.b16 %v171, %v170
  %v232 = vpack.c.b16 %v173, %v172
  %v233 = vpack.c.b16 %v175, %v174
  %v234 = vpack.c.b16 %v177, %v176
  %v235 = vpack.c.b16 %v179, %v178
  %v236 = vpack.c.b16 %v181, %v180
  %v237 = vpack.c.b16 %v183, %v182
  %v238 = vpack.c.b16 %v185, %v184
  %v239 = vpack.c.b16 %v187, %v186
  %v240 = vpack.c.b16 %v189, %v188
  %v241 = vpack.c.b16 %v191, %v190
  %v242 = vpack.c.b16 %v193, %v192
  %v243 = vpack.c.b16 %v195, %v194
  %v244 = vpack.c.b16 %v197, %v196
  %v245 = vpack.c.b16 %v199, %v198
  %v246 = vpack.c.b16 %v201, %v200
  %v247 = vpack.c.b16 %v203, %v202
  %v248 = vpack.c.b16 %v205, %v204
  %v249 = vpack.c.b16 %v207, %v206
  %v250 = vpack.c.b16 %v209, %v208
  %v251 = vpack.c.b16 %v211, %v210
  %v252 = vpack.c.b16 %v213, %v212
  %v253 = vpack.c.b16 %v215, %v214
  %v254 = vpack.c.b16 %v217, %v216
  %v255 = vpack.c.b16 %v219, %v218
  %v256 = vpack.c.b16 %v221, %v220
  %v257 = vpack.c.b16 %v223, %v222
  %v258 = vpack.c.b16 %v225, %v224
  %v259 = vpack.c.b16 %v227, %v226
  %292 = vmatprep.subr.bf16.mxu0 0
  %293 = vmatpush1.bf16.msra.mxu0 %v228
  %294 = vmatprep.subr.bf16.mxu0 0
  %295 = vmatpush1.bf16.msra.mxu0 %v229
  %296 = vmatprep.subr.bf16.mxu0 0
  %297 = vmatpush1.bf16.msra.mxu0 %v230
  %298 = vmatprep.subr.bf16.mxu0 0
  %299 = vmatpush1.bf16.msra.mxu0 %v231
  %300 = vmatprep.subr.bf16.mxu0 0
  %301 = vmatpush1.bf16.msra.mxu0 %v232
  %302 = vmatprep.subr.bf16.mxu0 0
  %303 = vmatpush1.bf16.msra.mxu0 %v233
  %304 = vmatprep.subr.bf16.mxu0 0
  %305 = vmatpush1.bf16.msra.mxu0 %v234
  %306 = vmatprep.subr.bf16.mxu0 0
  %307 = vmatpush1.bf16.msra.mxu0 %v235
  %308 = vmatprep.subr.bf16.mxu0 0
  %309 = vmatpush1.bf16.msra.mxu0 %v236
  %310 = vmatprep.subr.bf16.mxu0 0
  %311 = vmatpush1.bf16.msra.mxu0 %v237
  %312 = vmatprep.subr.bf16.mxu0 0
  %313 = vmatpush1.bf16.msra.mxu0 %v238
  %314 = vmatprep.subr.bf16.mxu0 0
  %315 = vmatpush1.bf16.msra.mxu0 %v239
  %316 = vmatprep.subr.bf16.mxu0 0
  %317 = vmatpush1.bf16.msra.mxu0 %v240
  %318 = vmatprep.subr.bf16.mxu0 0
  %319 = vmatpush1.bf16.msra.mxu0 %v241
  %320 = vmatprep.subr.bf16.mxu0 0
  %321 = vmatpush1.bf16.msra.mxu0 %v242
  %322 = vmatprep.subr.bf16.mxu0 0
  %323 = vmatpush1.bf16.msra.mxu0 %v243
  %324 = vmatprep.mubr.bf16.mxu0 %v93
  %325 = vmatmul.mubr.bf16.gmra.mrb[0].mxu0 %v92
  %v326 = vpop.f32.mrb[0].mxu0
  %v327 = vadd.f32 0.0, %v326
  %v328 = vpop.f32.mrb[0].mxu0
  %v329 = vpop.f32.mrb[0].mxu0
  %v330 = vadd.f32 0.0, %v329
  %v331 = vpop.f32.mrb[0].mxu0
  %332 = vdwg.mxu0
  %333 = vmatprep.subr.bf16.mxu0 0
  %334 = vmatpush1.bf16.msra.mxu0 %v244
  %335 = vmatprep.subr.bf16.mxu0 0
  %336 = vmatpush1.bf16.msra.mxu0 %v245
  %337 = vmatprep.subr.bf16.mxu0 0
  %338 = vmatpush1.bf16.msra.mxu0 %v246
  %339 = vmatprep.subr.bf16.mxu0 0
  %340 = vmatpush1.bf16.msra.mxu0 %v247
  %341 = vmatprep.subr.bf16.mxu0 0
  %342 = vmatpush1.bf16.msra.mxu0 %v248
  %343 = vmatprep.subr.bf16.mxu0 0
  %344 = vmatpush1.bf16.msra.mxu0 %v249
  %345 = vmatprep.subr.bf16.mxu0 0
  %346 = vmatpush1.bf16.msra.mxu0 %v250
  %347 = vmatprep.subr.bf16.mxu0 0
  %348 = vmatpush1.bf16.msra.mxu0 %v251
  %349 = vmatprep.subr.bf16.mxu0 0
  %350 = vmatpush1.bf16.msra.mxu0 %v252
  %351 = vmatprep.subr.bf16.mxu0 0
  %352 = vmatpush1.bf16.msra.mxu0 %v253
  %353 = vmatprep.subr.bf16.mxu0 0
  %354 = vmatpush1.bf16.msra.mxu0 %v254
  %355 = vmatprep.subr.bf16.mxu0 0
  %356 = vmatpush1.bf16.msra.mxu0 %v255
  %357 = vmatprep.subr.bf16.mxu0 0
  %358 = vmatpush1.bf16.msra.mxu0 %v256
  %359 = vmatprep.subr.bf16.mxu0 0
  %360 = vmatpush1.bf16.msra.mxu0 %v257
  %361 = vmatprep.subr.bf16.mxu0 0
  %362 = vmatpush1.bf16.msra.mxu0 %v258
  %363 = vmatprep.subr.bf16.mxu0 0
  %364 = vmatpush1.bf16.msra.mxu0 %v259
  %365 = vmatprep.mubr.bf16.mxu0 %v95
  %366 = vmatmul.mubr.bf16.gmra.mrb[0].mxu0 %v94
  %v367 = vpop.f32.mrb[0].mxu0
  %v368 = vadd.f32 %v327, %v367
  %v369 = vpop.f32.mrb[0].mxu0
  %v370 = vpop.f32.mrb[0].mxu0
  %v371 = vadd.f32 %v330, %v370
  %v372 = vpop.f32.mrb[0].mxu0
  %373 = vdwg.mxu0
  %s374 = scalar_lea.vmem %s0, 256
  %v375 = vld [vmem:[%s374] sm:$0xf]
  %v376 = vld [vmem:[%s374 + $0x4] sm:$0xf]
  %v377 = vld [vmem:[%s374 + $0x8] sm:$0xf]
  %v378 = vld [vmem:[%s374 + $0xc] sm:$0xf]
  %v379 = vld [vmem:[%s374 + $0x10] sm:$0xf]
  %v380 = vld [vmem:[%s374 + $0x14] sm:$0xf]
  %v381 = vld [vmem:[%s374 + $0x18] sm:$0xf]
  %v382 = vld [vmem:[%s374 + $0x1c] sm:$0xf]
  %v383 = vld [vmem:[%s374 + $0x20] sm:$0xf]
  %v384 = vld [vmem:[%s374 + $0x24] sm:$0xf]
  %v385 = vld [vmem:[%s374 + $0x28] sm:$0xf]
  %v386 = vld [vmem:[%s374 + $0x2c] sm:$0xf]
  %v387 = vld [vmem:[%s374 + $0x30] sm:$0xf]
  %v388 = vld [vmem:[%s374 + $0x34] sm:$0xf]
  %v389 = vld [vmem:[%s374 + $0x38] sm:$0xf]
  %v390 = vld [vmem:[%s374 + $0x3c] sm:$0xf]
  %v391 = vld [vmem:[%s374 + $0x40] sm:$0xf]
  %v392 = vld [vmem:[%s374 + $0x44] sm:$0xf]
  %v393 = vld [vmem:[%s374 + $0x48] sm:$0xf]
  %v394 = vld [vmem:[%s374 + $0x4c] sm:$0xf]
  %v395 = vld [vmem:[%s374 + $0x50] sm:$0xf]
  %v396 = vld [vmem:[%s374 + $0x54] sm:$0xf]
  %v397 = vld [vmem:[%s374 + $0x58] sm:$0xf]
  %v398 = vld [vmem:[%s374 + $0x5c] sm:$0xf]
  %v399 = vld [vmem:[%s374 + $0x60] sm:$0xf]
  %v400 = vld [vmem:[%s374 + $0x64] sm:$0xf]
  %v401 = vld [vmem:[%s374 + $0x68] sm:$0xf]
  %v402 = vld [vmem:[%s374 + $0x6c] sm:$0xf]
  %v403 = vld [vmem:[%s374 + $0x70] sm:$0xf]
  %v404 = vld [vmem:[%s374 + $0x74] sm:$0xf]
  %v405 = vld [vmem:[%s374 + $0x78] sm:$0xf]
  %v406 = vld [vmem:[%s374 + $0x7c] sm:$0xf]
  %v407 = vld [vmem:[%s374 + $0x80] sm:$0xf]
  %v408 = vld [vmem:[%s374 + $0x84] sm:$0xf]
  %v409 = vld [vmem:[%s374 + $0x88] sm:$0xf]
  %v410 = vld [vmem:[%s374 + $0x8c] sm:$0xf]
  %v411 = vld [vmem:[%s374 + $0x90] sm:$0xf]
  %v412 = vld [vmem:[%s374 + $0x94] sm:$0xf]
  %v413 = vld [vmem:[%s374 + $0x98] sm:$0xf]
  %v414 = vld [vmem:[%s374 + $0x9c] sm:$0xf]
  %v415 = vld [vmem:[%s374 + $0xa0] sm:$0xf]
  %v416 = vld [vmem:[%s374 + $0xa4] sm:$0xf]
  %v417 = vld [vmem:[%s374 + $0xa8] sm:$0xf]
  %v418 = vld [vmem:[%s374 + $0xac] sm:$0xf]
  %v419 = vld [vmem:[%s374 + $0xb0] sm:$0xf]
  %v420 = vld [vmem:[%s374 + $0xb4] sm:$0xf]
  %v421 = vld [vmem:[%s374 + $0xb8] sm:$0xf]
  %v422 = vld [vmem:[%s374 + $0xbc] sm:$0xf]
  %v423 = vld [vmem:[%s374 + $0xc0] sm:$0xf]
  %v424 = vld [vmem:[%s374 + $0xc4] sm:$0xf]
  %v425 = vld [vmem:[%s374 + $0xc8] sm:$0xf]
  %v426 = vld [vmem:[%s374 + $0xcc] sm:$0xf]
  %v427 = vld [vmem:[%s374 + $0xd0] sm:$0xf]
  %v428 = vld [vmem:[%s374 + $0xd4] sm:$0xf]
  %v429 = vld [vmem:[%s374 + $0xd8] sm:$0xf]
  %v430 = vld [vmem:[%s374 + $0xdc] sm:$0xf]
  %v431 = vld [vmem:[%s374 + $0xe0] sm:$0xf]
  %v432 = vld [vmem:[%s374 + $0xe4] sm:$0xf]
  %v433 = vld [vmem:[%s374 + $0xe8] sm:$0xf]
  %v434 = vld [vmem:[%s374 + $0xec] sm:$0xf]
  %v435 = vld [vmem:[%s374 + $0xf0] sm:$0xf]
  %v436 = vld [vmem:[%s374 + $0xf4] sm:$0xf]
  %v437 = vld [vmem:[%s374 + $0xf8] sm:$0xf]
  %v438 = vld [vmem:[%s374 + $0xfc] sm:$0xf]
  %v503 = vunpack.c.l.b16 %v375
  %v504 = vunpack.c.l.b16 %v376
  %v505 = vunpack.c.l.b16 %v377
  %v506 = vunpack.c.l.b16 %v378
  %v507 = vunpack.c.l.b16 %v379
  %v508 = vunpack.c.l.b16 %v380
  %v509 = vunpack.c.l.b16 %v381
  %v510 = vunpack.c.l.b16 %v382
  %v511 = vunpack.c.l.b16 %v383
  %v512 = vunpack.c.l.b16 %v384
  %v513 = vunpack.c.l.b16 %v385
  %v514 = vunpack.c.l.b16 %v386
  %v515 = vunpack.c.l.b16 %v387
  %v516 = vunpack.c.l.b16 %v388
  %v517 = vunpack.c.l.b16 %v389
  %v518 = vunpack.c.l.b16 %v390
  %v519 = vunpack.c.l.b16 %v391
  %v520 = vunpack.c.l.b16 %v392
  %v521 = vunpack.c.l.b16 %v393
  %v522 = vunpack.c.l.b16 %v394
  %v523 = vunpack.c.l.b16 %v395
  %v524 = vunpack.c.l.b16 %v396
  %v525 = vunpack.c.l.b16 %v397
  %v526 = vunpack.c.l.b16 %v398
  %v527 = vunpack.c.l.b16 %v399
  %v528 = vunpack.c.l.b16 %v400
  %v529 = vunpack.c.l.b16 %v401
  %v530 = vunpack.c.l.b16 %v402
  %v531 = vunpack.c.l.b16 %v403
  %v532 = vunpack.c.l.b16 %v404
  %v533 = vunpack.c.l.b16 %v405
  %v534 = vunpack.c.l.b16 %v406
  %v535 = vunpack.c.l.b16 %v407
  %v536 = vunpack.c.l.b16 %v408
  %v537 = vunpack.c.l.b16 %v409
  %v538 = vunpack.c.l.b16 %v410
  %v539 = vunpack.c.l.b16 %v411
  %v540 = vunpack.c.l.b16 %v412
  %v541 = vunpack.c.l.b16 %v413
  %v542 = vunpack.c.l.b16 %v414
  %v543 = vunpack.c.l.b16 %v415
  %v544 = vunpack.c.l.b16 %v416
  %v545 = vunpack.c.l.b16 %v417
  %v546 = vunpack.c.l.b16 %v418
  %v547 = vunpack.c.l.b16 %v419
  %v548 = vunpack.c.l.b16 %v420
  %v549 = vunpack.c.l.b16 %v421
  %v550 = vunpack.c.l.b16 %v422
  %v551 = vunpack.c.l.b16 %v423
  %v552 = vunpack.c.l.b16 %v424
  %v553 = vunpack.c.l.b16 %v425
  %v554 = vunpack.c.l.b16 %v426
  %v555 = vunpack.c.l.b16 %v427
  %v556 = vunpack.c.l.b16 %v428
  %v557 = vunpack.c.l.b16 %v429
  %v558 = vunpack.c.l.b16 %v430
  %v559 = vunpack.c.l.b16 %v431
  %v560 = vunpack.c.l.b16 %v432
  %v561 = vunpack.c.l.b16 %v433
  %v562 = vunpack.c.l.b16 %v434
  %v563 = vunpack.c.l.b16 %v435
  %v564 = vunpack.c.l.b16 %v436
  %v565 = vunpack.c.l.b16 %v437
  %v566 = vunpack.c.l.b16 %v438
  %v567 = vpack.c.b16 %v504, %v503
  %v568 = vpack.c.b16 %v506, %v505
  %v569 = vpack.c.b16 %v508, %v507
  %v570 = vpack.c.b16 %v510, %v509
  %v571 = vpack.c.b16 %v512, %v511
  %v572 = vpack.c.b16 %v514, %v513
  %v573 = vpack.c.b16 %v516, %v515
  %v574 = vpack.c.b16 %v518, %v517
  %v575 = vpack.c.b16 %v520, %v519
  %v576 = vpack.c.b16 %v522, %v521
  %v577 = vpack.c.b16 %v524, %v523
  %v578 = vpack.c.b16 %v526, %v525
  %v579 = vpack.c.b16 %v528, %v527
  %v580 = vpack.c.b16 %v530, %v529
  %v581 = vpack.c.b16 %v532, %v531
  %v582 = vpack.c.b16 %v534, %v533
  %v583 = vpack.c.b16 %v536, %v535
  %v584 = vpack.c.b16 %v538, %v537
  %v585 = vpack.c.b16 %v540, %v539
  %v586 = vpack.c.b16 %v542, %v541
  %v587 = vpack.c.b16 %v544, %v543
  %v588 = vpack.c.b16 %v546, %v545
  %v589 = vpack.c.b16 %v548, %v547
  %v590 = vpack.c.b16 %v550, %v549
  %v591 = vpack.c.b16 %v552, %v551
  %v592 = vpack.c.b16 %v554, %v553
  %v593 = vpack.c.b16 %v556, %v555
  %v594 = vpack.c.b16 %v558, %v557
  %v595 = vpack.c.b16 %v560, %v559
  %v596 = vpack.c.b16 %v562, %v561
  %v597 = vpack.c.b16 %v564, %v563
  %v598 = vpack.c.b16 %v566, %v565
  %631 = vmatprep.subr.bf16.mxu0 0
  %632 = vmatpush1.bf16.msra.mxu0 %v567
  %633 = vmatprep.subr.bf16.mxu0 0
  %634 = vmatpush1.bf16.msra.mxu0 %v568
  %635 = vmatprep.subr.bf16.mxu0 0
  %636 = vmatpush1.bf16.msra.mxu0 %v569
  %637 = vmatprep.subr.bf16.mxu0 0
  %638 = vmatpush1.bf16.msra.mxu0 %v570
  %639 = vmatprep.subr.bf16.mxu0 0
  %640 = vmatpush1.bf16.msra.mxu0 %v571
  %641 = vmatprep.subr.bf16.mxu0 0
  %642 = vmatpush1.bf16.msra.mxu0 %v572
  %643 = vmatprep.subr.bf16.mxu0 0
  %644 = vmatpush1.bf16.msra.mxu0 %v573
  %645 = vmatprep.subr.bf16.mxu0 0
  %646 = vmatpush1.bf16.msra.mxu0 %v574
  %647 = vmatprep.subr.bf16.mxu0 0
  %648 = vmatpush1.bf16.msra.mxu0 %v575
  %649 = vmatprep.subr.bf16.mxu0 0
  %650 = vmatpush1.bf16.msra.mxu0 %v576
  %651 = vmatprep.subr.bf16.mxu0 0
  %652 = vmatpush1.bf16.msra.mxu0 %v577
  %653 = vmatprep.subr.bf16.mxu0 0
  %654 = vmatpush1.bf16.msra.mxu0 %v578
  %655 = vmatprep.subr.bf16.mxu0 0
  %656 = vmatpush1.bf16.msra.mxu0 %v579
  %657 = vmatprep.subr.bf16.mxu0 0
  %658 = vmatpush1.bf16.msra.mxu0 %v580
  %659 = vmatprep.subr.bf16.mxu0 0
  %660 = vmatpush1.bf16.msra.mxu0 %v581
  %661 = vmatprep.subr.bf16.mxu0 0
  %662 = vmatpush1.bf16.msra.mxu0 %v582
  %663 = vmatprep.mubr.bf16.mxu0 %v93
  %664 = vmatmul.mubr.bf16.gmra.mrb[0].mxu0 %v92
  %v665 = vpop.f32.mrb[0].mxu0
  %v666 = vadd.f32 0.0, %v665
  %v667 = vpop.f32.mrb[0].mxu0
  %v668 = vpop.f32.mrb[0].mxu0
  %v669 = vadd.f32 0.0, %v668
  %v670 = vpop.f32.mrb[0].mxu0
  %671 = vdwg.mxu0
  %672 = vmatprep.subr.bf16.mxu0 0
  %673 = vmatpush1.bf16.msra.mxu0 %v583
  %674 = vmatprep.subr.bf16.mxu0 0
  %675 = vmatpush1.bf16.msra.mxu0 %v584
  %676 = vmatprep.subr.bf16.mxu0 0
  %677 = vmatpush1.bf16.msra.mxu0 %v585
  %678 = vmatprep.subr.bf16.mxu0 0
  %679 = vmatpush1.bf16.msra.mxu0 %v586
  %680 = vmatprep.subr.bf16.mxu0 0
  %681 = vmatpush1.bf16.msra.mxu0 %v587
  %682 = vmatprep.subr.bf16.mxu0 0
  %683 = vmatpush1.bf16.msra.mxu0 %v588
  %684 = vmatprep.subr.bf16.mxu0 0
  %685 = vmatpush1.bf16.msra.mxu0 %v589
  %686 = vmatprep.subr.bf16.mxu0 0
  %687 = vmatpush1.bf16.msra.mxu0 %v590
  %688 = vmatprep.subr.bf16.mxu0 0
  %689 = vmatpush1.bf16.msra.mxu0 %v591
  %690 = vmatprep.subr.bf16.mxu0 0
  %691 = vmatpush1.bf16.msra.mxu0 %v592
  %692 = vmatprep.subr.bf16.mxu0 0
  %693 = vmatpush1.bf16.msra.mxu0 %v593
  %694 = vmatprep.subr.bf16.mxu0 0
  %695 = vmatpush1.bf16.msra.mxu0 %v594
  %696 = vmatprep.subr.bf16.mxu0 0
  %697 = vmatpush1.bf16.msra.mxu0 %v595
  %698 = vmatprep.subr.bf16.mxu0 0
  %699 = vmatpush1.bf16.msra.mxu0 %v596
  %700 = vmatprep.subr.bf16.mxu0 0
  %701 = vmatpush1.bf16.msra.mxu0 %v597
  %702 = vmatprep.subr.bf16.mxu0 0
  %703 = vmatpush1.bf16.msra.mxu0 %v598
  %704 = vmatprep.mubr.bf16.mxu0 %v95
  %705 = vmatmul.mubr.bf16.gmra.mrb[0].mxu0 %v94
  %v706 = vpop.f32.mrb[0].mxu0
  %v707 = vadd.f32 %v666, %v706
  %v708 = vpop.f32.mrb[0].mxu0
  %v709 = vpop.f32.mrb[0].mxu0
  %v710 = vadd.f32 %v669, %v709
  %v711 = vpop.f32.mrb[0].mxu0
  %712 = vdwg.mxu0
  %vm713 = vcmask 523264
  %v714 = vsel %vm713, %v368, 0.0
  %715 = vadd.xlane.f32.xlu0 %v714
  %v716 = vpop.xlane.xlu0 %715
  %v717 = vsel %vm713, %v371, 0.0
  %718 = vadd.xlane.f32.xlu0 %v717
  %v719 = vpop.xlane.xlu0 %718
  %v720 = vmul.f32 %v368, %v368
  %v721 = vmul.f32 %v371, %v371
  %v722 = vsel %vm713, %v720, 0.0
  %723 = vadd.xlane.f32.xlu0 %v722
  %v724 = vpop.xlane.xlu0 %723
  %v725 = vsel %vm713, %v721, 0.0
  %726 = vadd.xlane.f32.xlu0 %v725
  %v727 = vpop.xlane.xlu0 %726
  %v728 = vsel %vm713, %v707, 0.0
  %729 = vadd.xlane.f32.xlu0 %v728
  %v730 = vpop.xlane.xlu0 %729
  %v731 = vsel %vm713, %v710, 0.0
  %732 = vadd.xlane.f32.xlu0 %v731
  %v733 = vpop.xlane.xlu0 %732
  %v734 = vadd.f32 %v716, %v730
  %v735 = vadd.f32 %v719, %v733
  %v736 = vmul.f32 %v707, %v707
  %v737 = vmul.f32 %v710, %v710
  %v738 = vsel %vm713, %v736, 0.0
  %739 = vadd.xlane.f32.xlu0 %v738
  %v740 = vpop.xlane.xlu0 %739
  %v741 = vsel %vm713, %v737, 0.0
  %742 = vadd.xlane.f32.xlu0 %v741
  %v743 = vpop.xlane.xlu0 %742
  %v744 = vadd.f32 %v724, %v740
  %v745 = vadd.f32 %v727, %v743
  %v746 = vmul.f32 %v734, 0.0078125
  %v747 = vmul.f32 %v735, 0.0078125
  %v748 = vmul.f32 %v744, 0.0078125
  %v749 = vmul.f32 %v745, 0.0078125
  %v750 = vmul.f32 %v746, %v746
  %v751 = vmul.f32 %v747, %v747
  %v752 = vsub.f32 %v748, %v750
  %v753 = vsub.f32 %v749, %v751
  %v754 = vadd.f32 %v752, 1e-05
  %v755 = vadd.f32 %v753, 1e-05
  %v756 = vrsqrt.pop %v754
  %v757 = vrsqrt.pop %v755
  %v758 = vsub.f32 %v368, %v746
  %v759 = vsub.f32 %v371, %v747
  %v760 = vmul.f32 %v758, %v756
  %v761 = vmul.f32 %v759, %v757
  %v762 = vmax.f32 %v760, 0.0
  %v763 = vmax.f32 %v761, 0.0
  %v764 = vpack.c.bf16 %v763, %v762
  %v766 = vunpack.c.l.b16 %v764
  %v767 = vunpack.c.h.b16 %v764
  %v768 = vpack.c.b16 %v766, %v766
  %v769 = vpack.c.b16 %v767, %v767
  %vm772 = vcmask 519168
  %773 = vst.msk [vmem:[%s2] sm:$0xf] %vm772, %v768
  %774 = vst.msk [vmem:[%s2 + $0x4] sm:$0xf] %vm772, %v769
  %v775 = vsub.f32 %v707, %v746
  %v776 = vsub.f32 %v710, %v747
  %v777 = vmul.f32 %v775, %v756
  %v778 = vmul.f32 %v776, %v757
  %v779 = vmax.f32 %v777, 0.0
  %v780 = vmax.f32 %v778, 0.0
  %v781 = vpack.c.bf16 %v780, %v779
  %v783 = vunpack.c.l.b16 %v781
  %v784 = vunpack.c.h.b16 %v781
  %v785 = vpack.c.b16 %v783, %v783
  %v786 = vpack.c.b16 %v784, %v784
  %s789 = scalar_lea.vmem %s2, 8
  %790 = vst.msk [vmem:[%s789] sm:$0xf] %vm772, %v785
  %791 = vst.msk [vmem:[%s789 + $0x4] sm:$0xf] %vm772, %v786
  // Predicated region
  $region10: #{conv_generator_forward.5} parent=0 // pred_check
    _
  $region11: #{conv_generator_forward.5} parent=0 // pred_check_branch
    %793 = sbr.rel (0) target = $region13
  $region12: #{conv_generator_forward.5} parent=0 // pred_region
    _
  $region13: #{conv_generator_forward.5} parent=0 // pred_fallthru
    _
  // Predicated region
  $region14: #{conv_generator_forward.5} parent=0 // pred_check
    _
  $region15: #{conv_generator_forward.5} parent=0 // pred_check_branch
    %795 = sbr.rel (0) target = $region17
  $region16: #{conv_generator_forward.5} parent=0 // pred_region
    _
  $region17: #{conv_generator_forward.5} parent=0 // pred_fallthru
    _

// kernel: conv_generator_forward.6
$region0: #{conv_generator_forward.6}
  #allocation0 [shape = 'u32[]', space=smem, size = 0x4, offset = 0x4, fixed_abs, tag = 'smem constant byte address 0x4 - core index']
  #allocation1 [shape = 'u32[144,128]{1,0:T(1,128)}', space=vmem, size = 0x12000, scoped, tag = 'internal scratch']
  %s0 = inlined_call_operand.vmem [shape: bf16[2,256,256], index: 0, kind: input, shape index: {}]
  %s1 = inlined_call_operand.vmem [shape: bf16[8,256], index: 1, kind: input, shape index: {}]
  %s2 = inlined_call_operand.vmem [shape: bf16[2,8,256], index: 2, kind: output, shape index: {}]
  %s3 = sld [smem:[#allocation0]]
  $region18: #{conv_generator_forward.6} parent=0
    _
  %s5 = ssub.s32 1, %s3
  %s6 = scalar_select 0, %s5, %s3
  // Predicated region
  $region2: #{conv_generator_forward.6} parent=0 // pred_check
    _
  $region3: #{conv_generator_forward.6} parent=0 // pred_check_branch
    %8 = sbr.rel (0) target = $region5
  $region4: #{conv_generator_forward.6} parent=0 // pred_region
    _
  $region5: #{conv_generator_forward.6} parent=0 // pred_fallthru
    _
  // Predicated region
  $region6: #{conv_generator_forward.6} parent=0 // pred_check
    _
  $region7: #{conv_generator_forward.6} parent=0 // pred_check_branch
    %10 = sbr.rel (0) target = $region9
  $region8: #{conv_generator_forward.6} parent=0 // pred_region
    _
  $region9: #{conv_generator_forward.6} parent=0 // pred_fallthru
    _
  %v11 = vld [vmem:[%s1] sm:$0xff]
  %v12 = vld [vmem:[%s0] sm:$0xff]
  %v13 = vld [vmem:[%s0 + $0x8] sm:$0xff]
  %v14 = vld [vmem:[%s0 + $0x10] sm:$0xff]
  %v15 = vld [vmem:[%s0 + $0x18] sm:$0xff]
  %v16 = vld [vmem:[%s0 + $0x20] sm:$0xff]
  %v17 = vld [vmem:[%s0 + $0x28] sm:$0xff]
  %v18 = vld [vmem:[%s0 + $0x30] sm:$0xff]
  %v19 = vld [vmem:[%s0 + $0x38] sm:$0xff]
  %v20 = vld [vmem:[%s0 + $0x40] sm:$0xff]
  %v21 = vld [vmem:[%s0 + $0x48] sm:$0xff]
  %v22 = vld [vmem:[%s0 + $0x50] sm:$0xff]
  %v23 = vld [vmem:[%s0 + $0x58] sm:$0xff]
  %v24 = vld [vmem:[%s0 + $0x60] sm:$0xff]
  %v25 = vld [vmem:[%s0 + $0x68] sm:$0xff]
  %v26 = vld [vmem:[%s0 + $0x70] sm:$0xff]
  %v27 = vld [vmem:[%s0 + $0x78] sm:$0xff]
  %v28 = vld [vmem:[%s0 + $0x80] sm:$0xff]
  %v29 = vld [vmem:[%s0 + $0x88] sm:$0xff]
  %v30 = vld [vmem:[%s0 + $0x90] sm:$0xff]
  %v31 = vld [vmem:[%s0 + $0x98] sm:$0xff]
  %v32 = vld [vmem:[%s0 + $0xa0] sm:$0xff]
  %v33 = vld [vmem:[%s0 + $0xa8] sm:$0xff]
  %v34 = vld [vmem:[%s0 + $0xb0] sm:$0xff]
  %v35 = vld [vmem:[%s0 + $0xb8] sm:$0xff]
  %v36 = vld [vmem:[%s0 + $0xc0] sm:$0xff]
  %v37 = vld [vmem:[%s0 + $0xc8] sm:$0xff]
  %v38 = vld [vmem:[%s0 + $0xd0] sm:$0xff]
  %v39 = vld [vmem:[%s0 + $0xd8] sm:$0xff]
  %v40 = vld [vmem:[%s0 + $0xe0] sm:$0xff]
  %v41 = vld [vmem:[%s0 + $0xe8] sm:$0xff]
  %v42 = vld [vmem:[%s0 + $0xf0] sm:$0xff]
  %v43 = vld [vmem:[%s0 + $0xf8] sm:$0xff]
  %v45 = vunpack.c.l.b16 %v11
  %v46 = vunpack.c.h.b16 %v11
  %v47 = vpack.c.b16 %v45, %v45
  %v48 = vpack.c.b16 %v46, %v46
  %v83 = vunpack.c.l.b16 %v12
  %v84 = vunpack.c.h.b16 %v12
  %v85 = vunpack.c.l.b16 %v13
  %v86 = vunpack.c.h.b16 %v13
  %v87 = vunpack.c.l.b16 %v14
  %v88 = vunpack.c.h.b16 %v14
  %v89 = vunpack.c.l.b16 %v15
  %v90 = vunpack.c.h.b16 %v15
  %v91 = vunpack.c.l.b16 %v16
  %v92 = vunpack.c.h.b16 %v16
  %v93 = vunpack.c.l.b16 %v17
  %v94 = vunpack.c.h.b16 %v17
  %v95 = vunpack.c.l.b16 %v18
  %v96 = vunpack.c.h.b16 %v18
  %v97 = vunpack.c.l.b16 %v19
  %v98 = vunpack.c.h.b16 %v19
  %v99 = vunpack.c.l.b16 %v20
  %v100 = vunpack.c.h.b16 %v20
  %v101 = vunpack.c.l.b16 %v21
  %v102 = vunpack.c.h.b16 %v21
  %v103 = vunpack.c.l.b16 %v22
  %v104 = vunpack.c.h.b16 %v22
  %v105 = vunpack.c.l.b16 %v23
  %v106 = vunpack.c.h.b16 %v23
  %v107 = vunpack.c.l.b16 %v24
  %v108 = vunpack.c.h.b16 %v24
  %v109 = vunpack.c.l.b16 %v25
  %v110 = vunpack.c.h.b16 %v25
  %v111 = vunpack.c.l.b16 %v26
  %v112 = vunpack.c.h.b16 %v26
  %v113 = vunpack.c.l.b16 %v27
  %v114 = vunpack.c.h.b16 %v27
  %v115 = vunpack.c.l.b16 %v28
  %v116 = vunpack.c.h.b16 %v28
  %v117 = vunpack.c.l.b16 %v29
  %v118 = vunpack.c.h.b16 %v29
  %v119 = vunpack.c.l.b16 %v30
  %v120 = vunpack.c.h.b16 %v30
  %v121 = vunpack.c.l.b16 %v31
  %v122 = vunpack.c.h.b16 %v31
  %v123 = vunpack.c.l.b16 %v32
  %v124 = vunpack.c.h.b16 %v32
  %v125 = vunpack.c.l.b16 %v33
  %v126 = vunpack.c.h.b16 %v33
  %v127 = vunpack.c.l.b16 %v34
  %v128 = vunpack.c.h.b16 %v34
  %v129 = vunpack.c.l.b16 %v35
  %v130 = vunpack.c.h.b16 %v35
  %v131 = vunpack.c.l.b16 %v36
  %v132 = vunpack.c.h.b16 %v36
  %v133 = vunpack.c.l.b16 %v37
  %v134 = vunpack.c.h.b16 %v37
  %v135 = vunpack.c.l.b16 %v38
  %v136 = vunpack.c.h.b16 %v38
  %v137 = vunpack.c.l.b16 %v39
  %v138 = vunpack.c.h.b16 %v39
  %v139 = vunpack.c.l.b16 %v40
  %v140 = vunpack.c.h.b16 %v40
  %v141 = vunpack.c.l.b16 %v41
  %v142 = vunpack.c.h.b16 %v41
  %v143 = vunpack.c.l.b16 %v42
  %v144 = vunpack.c.h.b16 %v42
  %v145 = vunpack.c.l.b16 %v43
  %v146 = vunpack.c.h.b16 %v43
  %v147 = vpack.c.b16 %v85, %v83
  %v148 = vpack.c.b16 %v86, %v84
  %v149 = vpack.c.b16 %v89, %v87
  %v150 = vpack.c.b16 %v90, %v88
  %v151 = vpack.c.b16 %v93, %v91
  %v152 = vpack.c.b16 %v94, %v92
  %v153 = vpack.c.b16 %v97, %v95
  %v154 = vpack.c.b16 %v98, %v96
  %v155 = vpack.c.b16 %v101, %v99
  %v156 = vpack.c.b16 %v102, %v100
  %v157 = vpack.c.b16 %v105, %v103
  %v158 = vpack.c.b16 %v106, %v104
  %v159 = vpack.c.b16 %v109, %v107
  %v160 = vpack.c.b16 %v110, %v108
  %v161 = vpack.c.b16 %v113, %v111
  %v162 = vpack.c.b16 %v114, %v112
  %v163 = vpack.c.b16 %v117, %v115
  %v164 = vpack.c.b16 %v118, %v116
  %v165 = vpack.c.b16 %v121, %v119
  %v166 = vpack.c.b16 %v122, %v120
  %v167 = vpack.c.b16 %v125, %v123
  %v168 = vpack.c.b16 %v126, %v124
  %v169 = vpack.c.b16 %v129, %v127
  %v170 = vpack.c.b16 %v130, %v128
  %v171 = vpack.c.b16 %v133, %v131
  %v172 = vpack.c.b16 %v134, %v132
  %v173 = vpack.c.b16 %v137, %v135
  %v174 = vpack.c.b16 %v138, %v136
  %v175 = vpack.c.b16 %v141, %v139
  %v176 = vpack.c.b16 %v142, %v140
  %v177 = vpack.c.b16 %v145, %v143
  %v178 = vpack.c.b16 %v146, %v144
  %211 = vmatprep.subr.bf16.mxu0 %v148
  %212 = vmatpush1.bf16.msra.mxu0 %v147
  %213 = vmatprep.subr.bf16.mxu0 %v150
  %214 = vmatpush1.bf16.msra.mxu0 %v149
  %215 = vmatprep.subr.bf16.mxu0 %v152
  %216 = vmatpush1.bf16.msra.mxu0 %v151
  %217 = vmatprep.subr.bf16.mxu0 %v154
  %218 = vmatpush1.bf16.msra.mxu0 %v153
  %219 = vmatprep.subr.bf16.mxu0 %v156
  %220 = vmatpush1.bf16.msra.mxu0 %v155
  %221 = vmatprep.subr.bf16.mxu0 %v158
  %222 = vmatpush1.bf16.msra.mxu0 %v157
  %223 = vmatprep.subr.bf16.mxu0 %v160
  %224 = vmatpush1.bf16.msra.mxu0 %v159
  %225 = vmatprep.subr.bf16.mxu0 %v162
  %226 = vmatpush1.bf16.msra.mxu0 %v161
  %227 = vmatprep.subr.bf16.mxu0 %v164
  %228 = vmatpush1.bf16.msra.mxu0 %v163
  %229 = vmatprep.subr.bf16.mxu0 %v166
  %230 = vmatpush1.bf16.msra.mxu0 %v165
  %231 = vmatprep.subr.bf16.mxu0 %v168
  %232 = vmatpush1.bf16.msra.mxu0 %v167
  %233 = vmatprep.subr.bf16.mxu0 %v170
  %234 = vmatpush1.bf16.msra.mxu0 %v169
  %235 = vmatprep.subr.bf16.mxu0 %v172
  %236 = vmatpush1.bf16.msra.mxu0 %v171
  %237 = vmatprep.subr.bf16.mxu0 %v174
  %238 = vmatpush1.bf16.msra.mxu0 %v173
  %239 = vmatprep.subr.bf16.mxu0 %v176
  %240 = vmatpush1.bf16.msra.mxu0 %v175
  %241 = vmatprep.subr.bf16.mxu0 %v178
  %242 = vmatpush1.bf16.msra.mxu0 %v177
  %243 = vmatprep.mubr.bf16.mxu0 %v48
  %244 = vmatmul.mubr.bf16.gmra.mrb[0].mxu0 %v47
  %v245 = vpop.f32.mrb[0].mxu0
  %v246 = vadd.f32 0.0, %v245
  %v247 = vpop.f32.mrb[0].mxu0
  %v248 = vadd.f32 0.0, %v247
  %v249 = vpop.f32.mrb[0].mxu0
  %v250 = vpop.f32.mrb[0].mxu0
  %251 = vdwg.mxu0
  %s252 = scalar_lea.vmem %s0, 256
  %v253 = vld [vmem:[%s252] sm:$0xff]
  %v254 = vld [vmem:[%s252 + $0x8] sm:$0xff]
  %v255 = vld [vmem:[%s252 + $0x10] sm:$0xff]
  %v256 = vld [vmem:[%s252 + $0x18] sm:$0xff]
  %v257 = vld [vmem:[%s252 + $0x20] sm:$0xff]
  %v258 = vld [vmem:[%s252 + $0x28] sm:$0xff]
  %v259 = vld [vmem:[%s252 + $0x30] sm:$0xff]
  %v260 = vld [vmem:[%s252 + $0x38] sm:$0xff]
  %v261 = vld [vmem:[%s252 + $0x40] sm:$0xff]
  %v262 = vld [vmem:[%s252 + $0x48] sm:$0xff]
  %v263 = vld [vmem:[%s252 + $0x50] sm:$0xff]
  %v264 = vld [vmem:[%s252 + $0x58] sm:$0xff]
  %v265 = vld [vmem:[%s252 + $0x60] sm:$0xff]
  %v266 = vld [vmem:[%s252 + $0x68] sm:$0xff]
  %v267 = vld [vmem:[%s252 + $0x70] sm:$0xff]
  %v268 = vld [vmem:[%s252 + $0x78] sm:$0xff]
  %v269 = vld [vmem:[%s252 + $0x80] sm:$0xff]
  %v270 = vld [vmem:[%s252 + $0x88] sm:$0xff]
  %v271 = vld [vmem:[%s252 + $0x90] sm:$0xff]
  %v272 = vld [vmem:[%s252 + $0x98] sm:$0xff]
  %v273 = vld [vmem:[%s252 + $0xa0] sm:$0xff]
  %v274 = vld [vmem:[%s252 + $0xa8] sm:$0xff]
  %v275 = vld [vmem:[%s252 + $0xb0] sm:$0xff]
  %v276 = vld [vmem:[%s252 + $0xb8] sm:$0xff]
  %v277 = vld [vmem:[%s252 + $0xc0] sm:$0xff]
  %v278 = vld [vmem:[%s252 + $0xc8] sm:$0xff]
  %v279 = vld [vmem:[%s252 + $0xd0] sm:$0xff]
  %v280 = vld [vmem:[%s252 + $0xd8] sm:$0xff]
  %v281 = vld [vmem:[%s252 + $0xe0] sm:$0xff]
  %v282 = vld [vmem:[%s252 + $0xe8] sm:$0xff]
  %v283 = vld [vmem:[%s252 + $0xf0] sm:$0xff]
  %v284 = vld [vmem:[%s252 + $0xf8] sm:$0xff]
  %v317 = vunpack.c.l.b16 %v253
  %v318 = vunpack.c.h.b16 %v253
  %v319 = vunpack.c.l.b16 %v254
  %v320 = vunpack.c.h.b16 %v254
  %v321 = vunpack.c.l.b16 %v255
  %v322 = vunpack.c.h.b16 %v255
  %v323 = vunpack.c.l.b16 %v256
  %v324 = vunpack.c.h.b16 %v256
  %v325 = vunpack.c.l.b16 %v257
  %v326 = vunpack.c.h.b16 %v257
  %v327 = vunpack.c.l.b16 %v258
  %v328 = vunpack.c.h.b16 %v258
  %v329 = vunpack.c.l.b16 %v259
  %v330 = vunpack.c.h.b16 %v259
  %v331 = vunpack.c.l.b16 %v260
  %v332 = vunpack.c.h.b16 %v260
  %v333 = vunpack.c.l.b16 %v261
  %v334 = vunpack.c.h.b16 %v261
  %v335 = vunpack.c.l.b16 %v262
  %v336 = vunpack.c.h.b16 %v262
  %v337 = vunpack.c.l.b16 %v263
  %v338 = vunpack.c.h.b16 %v263
  %v339 = vunpack.c.l.b16 %v264
  %v340 = vunpack.c.h.b16 %v264
  %v341 = vunpack.c.l.b16 %v265
  %v342 = vunpack.c.h.b16 %v265
  %v343 = vunpack.c.l.b16 %v266
  %v344 = vunpack.c.h.b16 %v266
  %v345 = vunpack.c.l.b16 %v267
  %v346 = vunpack.c.h.b16 %v267
  %v347 = vunpack.c.l.b16 %v268
  %v348 = vunpack.c.h.b16 %v268
  %v349 = vunpack.c.l.b16 %v269
  %v350 = vunpack.c.h.b16 %v269
  %v351 = vunpack.c.l.b16 %v270
  %v352 = vunpack.c.h.b16 %v270
  %v353 = vunpack.c.l.b16 %v271
  %v354 = vunpack.c.h.b16 %v271
  %v355 = vunpack.c.l.b16 %v272
  %v356 = vunpack.c.h.b16 %v272
  %v357 = vunpack.c.l.b16 %v273
  %v358 = vunpack.c.h.b16 %v273
  %v359 = vunpack.c.l.b16 %v274
  %v360 = vunpack.c.h.b16 %v274
  %v361 = vunpack.c.l.b16 %v275
  %v362 = vunpack.c.h.b16 %v275
  %v363 = vunpack.c.l.b16 %v276
  %v364 = vunpack.c.h.b16 %v276
  %v365 = vunpack.c.l.b16 %v277
  %v366 = vunpack.c.h.b16 %v277
  %v367 = vunpack.c.l.b16 %v278
  %v368 = vunpack.c.h.b16 %v278
  %v369 = vunpack.c.l.b16 %v279
  %v370 = vunpack.c.h.b16 %v279
  %v371 = vunpack.c.l.b16 %v280
  %v372 = vunpack.c.h.b16 %v280
  %v373 = vunpack.c.l.b16 %v281
  %v374 = vunpack.c.h.b16 %v281
  %v375 = vunpack.c.l.b16 %v282
  %v376 = vunpack.c.h.b16 %v282
  %v377 = vunpack.c.l.b16 %v283
  %v378 = vunpack.c.h.b16 %v283
  %v379 = vunpack.c.l.b16 %v284
  %v380 = vunpack.c.h.b16 %v284
  %v381 = vpack.c.b16 %v319, %v317
  %v382 = vpack.c.b16 %v320, %v318
  %v383 = vpack.c.b16 %v323, %v321
  %v384 = vpack.c.b16 %v324, %v322
  %v385 = vpack.c.b16 %v327, %v325
  %v386 = vpack.c.b16 %v328, %v326
  %v387 = vpack.c.b16 %v331, %v329
  %v388 = vpack.c.b16 %v332, %v330
  %v389 = vpack.c.b16 %v335, %v333
  %v390 = vpack.c.b16 %v336, %v334
  %v391 = vpack.c.b16 %v339, %v337
  %v392 = vpack.c.b16 %v340, %v338
  %v393 = vpack.c.b16 %v343, %v341
  %v394 = vpack.c.b16 %v344, %v342
  %v395 = vpack.c.b16 %v347, %v345
  %v396 = vpack.c.b16 %v348, %v346
  %v397 = vpack.c.b16 %v351, %v349
  %v398 = vpack.c.b16 %v352, %v350
  %v399 = vpack.c.b16 %v355, %v353
  %v400 = vpack.c.b16 %v356, %v354
  %v401 = vpack.c.b16 %v359, %v357
  %v402 = vpack.c.b16 %v360, %v358
  %v403 = vpack.c.b16 %v363, %v361
  %v404 = vpack.c.b16 %v364, %v362
  %v405 = vpack.c.b16 %v367, %v365
  %v406 = vpack.c.b16 %v368, %v366
  %v407 = vpack.c.b16 %v371, %v369
  %v408 = vpack.c.b16 %v372, %v370
  %v409 = vpack.c.b16 %v375, %v373
  %v410 = vpack.c.b16 %v376, %v374
  %v411 = vpack.c.b16 %v379, %v377
  %v412 = vpack.c.b16 %v380, %v378
  %445 = vmatprep.subr.bf16.mxu0 %v382
  %446 = vmatpush1.bf16.msra.mxu0 %v381
  %447 = vmatprep.subr.bf16.mxu0 %v384
  %448 = vmatpush1.bf16.msra.mxu0 %v383
  %449 = vmatprep.subr.bf16.mxu0 %v386
  %450 = vmatpush1.bf16.msra.mxu0 %v385
  %451 = vmatprep.subr.bf16.mxu0 %v388
  %452 = vmatpush1.bf16.msra.mxu0 %v387
  %453 = vmatprep.subr.bf16.mxu0 %v390
  %454 = vmatpush1.bf16.msra.mxu0 %v389
  %455 = vmatprep.subr.bf16.mxu0 %v392
  %456 = vmatpush1.bf16.msra.mxu0 %v391
  %457 = vmatprep.subr.bf16.mxu0 %v394
  %458 = vmatpush1.bf16.msra.mxu0 %v393
  %459 = vmatprep.subr.bf16.mxu0 %v396
  %460 = vmatpush1.bf16.msra.mxu0 %v395
  %461 = vmatprep.subr.bf16.mxu0 %v398
  %462 = vmatpush1.bf16.msra.mxu0 %v397
  %463 = vmatprep.subr.bf16.mxu0 %v400
  %464 = vmatpush1.bf16.msra.mxu0 %v399
  %465 = vmatprep.subr.bf16.mxu0 %v402
  %466 = vmatpush1.bf16.msra.mxu0 %v401
  %467 = vmatprep.subr.bf16.mxu0 %v404
  %468 = vmatpush1.bf16.msra.mxu0 %v403
  %469 = vmatprep.subr.bf16.mxu0 %v406
  %470 = vmatpush1.bf16.msra.mxu0 %v405
  %471 = vmatprep.subr.bf16.mxu0 %v408
  %472 = vmatpush1.bf16.msra.mxu0 %v407
  %473 = vmatprep.subr.bf16.mxu0 %v410
  %474 = vmatpush1.bf16.msra.mxu0 %v409
  %475 = vmatprep.subr.bf16.mxu0 %v412
  %476 = vmatpush1.bf16.msra.mxu0 %v411
  %477 = vmatprep.mubr.bf16.mxu0 %v48
  %478 = vmatmul.mubr.bf16.gmra.mrb[0].mxu0 %v47
  %v479 = vpop.f32.mrb[0].mxu0
  %v480 = vadd.f32 0.0, %v479
  %v481 = vpop.f32.mrb[0].mxu0
  %v482 = vadd.f32 0.0, %v481
  %v483 = vpop.f32.mrb[0].mxu0
  %v484 = vpop.f32.mrb[0].mxu0
  %485 = vdwg.mxu0
  %v486 = vadd.f32 %v246, %v248
  %487 = vadd.xlane.f32.xlu0 %v486
  %v488 = vpop.xlane.xlu0 %487
  %v489 = vmul.f32 %v246, %v246
  %v490 = vmul.f32 %v248, %v248
  %v491 = vadd.f32 %v489, %v490
  %492 = vadd.xlane.f32.xlu0 %v491
  %v493 = vpop.xlane.xlu0 %492
  %v494 = vadd.f32 %v480, %v482
  %495 = vadd.xlane.f32.xlu0 %v494
  %v496 = vpop.xlane.xlu0 %495
  %v497 = vadd.f32 %v488, %v496
  %v498 = vmul.f32 %v480, %v480
  %v499 = vmul.f32 %v482, %v482
  %v500 = vadd.f32 %v498, %v499
  %501 = vadd.xlane.f32.xlu0 %v500
  %v502 = vpop.xlane.xlu0 %501
  %v503 = vadd.f32 %v493, %v502
  %v504 = vmul.f32 %v497, 0.001953125
  %v505 = vmul.f32 %v503, 0.001953125
  %v506 = vmul.f32 %v504, %v504
  %v507 = vsub.f32 %v505, %v506
  %v508 = vadd.f32 %v507, 1e-05
  %v509 = vrsqrt.pop %v508
  %v510 = vsub.f32 %v246, %v504
  %v511 = vsub.f32 %v248, %v504
  %v512 = vmul.f32 %v510, %v509
  %v513 = vmul.f32 %v511, %v509
  %v514 = vmax.f32 %v512, 0.0
  %v515 = vmax.f32 %v513, 0.0
  %v516 = vpack.c.bf16 %v514, %v514
  %v517 = vpack.c.bf16 %v515, %v515
  %v520 = vunpack.c.l.b16 %v516
  %v521 = vunpack.c.l.b16 %v517
  %v522 = vpack.c.b16 %v521, %v520
  %524 = vst [vmem:[%s2] sm:$0xff] %v522
  %v525 = vsub.f32 %v480, %v504
  %v526 = vsub.f32 %v482, %v504
  %v527 = vmul.f32 %v525, %v509
  %v528 = vmul.f32 %v526, %v509
  %v529 = vmax.f32 %v527, 0.0
  %v530 = vmax.f32 %v528, 0.0
  %v531 = vpack.c.bf16 %v529, %v529
  %v532 = vpack.c.bf16 %v530, %v530
  %v535 = vunpack.c.l.b16 %v531
  %v536 = vunpack.c.l.b16 %v532
  %v537 = vpack.c.b16 %v536, %v535
  %s539 = scalar_lea.vmem %s2, 8
  %540 = vst [vmem:[%s539] sm:$0xff] %v537
  // Predicated region
  $region10: #{conv_generator_forward.6} parent=0 // pred_check
    _
  $region11: #{conv_generator_forward.6} parent=0 // pred_check_branch
    %542 = sbr.rel (0) target = $region13
  $region12: #{conv_generator_forward.6} parent=0 // pred_region
    _
  $region13: #{conv_generator_forward.6} parent=0 // pred_fallthru
    _
  // Predicated region
  $region14: #{conv_generator_forward.6} parent=0 // pred_check
    _
  $region15: #{conv_generator_forward.6} parent=0 // pred_check_branch
    %544 = sbr.rel (0) target = $region17
  $region16: #{conv_generator_forward.6} parent=0 // pred_region
    _
  $region17: #{conv_generator_forward.6} parent=0 // pred_fallthru
    _

// kernel: conv_generator_forward.7
$region0: #{conv_generator_forward.7}
  #allocation0 [shape = 'u32[]', space=smem, size = 0x4, offset = 0x4, fixed_abs, tag = 'smem constant byte address 0x4 - core index']
  #allocation1 [shape = 'u32[144,128]{1,0:T(1,128)}', space=vmem, size = 0x12000, scoped, tag = 'internal scratch']
  %s0 = inlined_call_operand.vmem [shape: bf16[2,128,784], index: 0, kind: input, shape index: {}]
  %s1 = inlined_call_operand.vmem [shape: bf16[3,128], index: 1, kind: input, shape index: {}]
  %s2 = inlined_call_operand.vmem [shape: f32[3,1], index: 2, kind: input, shape index: {}]
  %s3 = inlined_call_operand.vmem [shape: f32[2,3,784], index: 3, kind: output, shape index: {}]
  %s4 = sld [smem:[#allocation0]]
  $region45: #{conv_generator_forward.7} parent=0
    _
  %s6 = ssub.s32 1, %s4
  %s7 = scalar_select 0, %s6, %s4
  loop: start=0, step=1, limit=4
  $region2: #{conv_generator_forward.7} parent=0 // loop_pre_header
    _
  $region3: #{conv_generator_forward.7} parent=0 // loop_header
    %s9 = sphi 0, %s13
    %p10 = scmp.ge.s32.totalorder %s9, 4
    %s19 = sphi 0, %s21
    %s22 = sphi 0, %s19
    %s23 = sphi 0, %s22
    %s39 = sphi 0, %s23
    %s43 = sphi 0, %s43
    %s45 = sphi 0, %s43
    %s46 = sphi 0, %s45
    %s60 = sphi 0, %s46
    %s64 = sphi 0, %s64
    %s66 = sphi 0, %s64
    %s67 = sphi 0, %s66
    %s81 = sphi 0, %s67
    %s87 = sphi 0, %s89
    %s90 = sphi 0, %s87
    %s91 = sphi 0, %s90
    %s107 = sphi 0, %s91
  $region4: #{conv_generator_forward.7} parent=0 // loop_header_branch
    %12 = sbr.rel (%p10) target = $region8
  $region5: #{conv_generator_forward.7} parent=0 // loop_body
    %s14 = ssub.s32 %s9, 1
    %s15 = ssub.s32 %s9, 2
    %s16 = sadd.s32 %s9, 1
    %s17 = ssub.s32 %s9, %s16
    %p18 = scmp.eq.s32.totalorder %s17, 0
    %s20 = sadd.s32 %s19, 1
    %s21 = scalar_select %p18, %s19, %s20
    %p24 = pneg %p18
    %p25 = scmp.eq.s32.totalorder %s9, 1
    %p26 = por %p24, %p25
    %p27 = scmp.ne.s32.totalorder %s19, %s22
    %p28 = scmp.eq.s32.totalorder %s9, 0
    %p29 = por %p27, %p28
    %p30 = scmp.ne.s32.totalorder %s19, %s22
    %p31 = scmp.eq.s32.totalorder %s14, 1
    %p32 = por %p30, %p31
    %p33 = scmp.ne.s32.totalorder %s22, %s23
    %p34 = scmp.eq.s32.totalorder %s14, 0
    %p35 = por %p33, %p34
    %p36 = scmp.ne.s32.totalorder %s22, %s23
    %p37 = scmp.eq.s32.totalorder %s15, 1
    %p38 = por %p36, %p37
    %p40 = scmp.ne.s32.totalorder %s23, %s39
    %p41 = scmp.eq.s32.totalorder %s15, 0
    %p42 = por %p40, %p41
    %s44 = sadd.s32 %s43, 1
    %p47 = scmp.eq.s32.totalorder %s9, 1
    %p48 = scmp.ne.s32.totalorder %s43, %s45
    %p49 = scmp.eq.s32.totalorder %s9, 0
    %p50 = por %p48, %p49
    %p51 = scmp.ne.s32.totalorder %s43, %s45
    %p52 = scmp.eq.s32.totalorder %s14, 1
    %p53 = por %p51, %p52
    %p54 = scmp.ne.s32.totalorder %s45, %s46
    %p55 = scmp.eq.s32.totalorder %s14, 0
    %p56 = por %p54, %p55
    %p57 = scmp.ne.s32.totalorder %s45, %s46
    %p58 = scmp.eq.s32.totalorder %s15, 1
    %p59 = por %p57, %p58
    %p61 = scmp.ne.s32.totalorder %s46, %s60
    %p62 = scmp.eq.s32.totalorder %s15, 0
    %p63 = por %p61, %p62
    %s65 = sadd.s32 %s64, 1
    %p68 = scmp.eq.s32.totalorder %s9, 1
    %p69 = scmp.ne.s32.totalorder %s64, %s66
    %p70 = scmp.eq.s32.totalorder %s9, 0
    %p71 = por %p69, %p70
    %p72 = scmp.ne.s32.totalorder %s64, %s66
    %p73 = scmp.eq.s32.totalorder %s14, 1
    %p74 = por %p72, %p73
    %p75 = scmp.ne.s32.totalorder %s66, %s67
    %p76 = scmp.eq.s32.totalorder %s14, 0
    %p77 = por %p75, %p76
    %p78 = scmp.ne.s32.totalorder %s66, %s67
    %p79 = scmp.eq.s32.totalorder %s15, 1
    %p80 = por %p78, %p79
    %p82 = scmp.ne.s32.totalorder %s67, %s81
    %p83 = scmp.eq.s32.totalorder %s15, 0
    %p84 = por %p82, %p83
    %s85 = ssub.s32 %s9, %s16
    %p86 = scmp.eq.s32.totalorder %s85, 0
    %s88 = sadd.s32 %s87, 1
    %s89 = scalar_select %p86, %s87, %s88
    %p92 = pneg %p86
    %p93 = scmp.eq.s32.totalorder %s9, 1
    %p94 = por %p92, %p93
    %p95 = scmp.ne.s32.totalorder %s87, %s90
    %p96 = scmp.eq.s32.totalorder %s9, 0
    %p97 = por %p95, %p96
    %p98 = scmp.ne.s32.totalorder %s87, %s90
    %p99 = scmp.eq.s32.totalorder %s14, 1
    %p100 = por %p98, %p99
    %p101 = scmp.ne.s32.totalorder %s90, %s91
    %p102 = scmp.eq.s32.totalorder %s14, 0
    %p103 = por %p101, %p102
    %p104 = scmp.ne.s32.totalorder %s90, %s91
    %p105 = scmp.eq.s32.totalorder %s15, 1
    %p106 = por %p104, %p105
    %p108 = scmp.ne.s32.totalorder %s91, %s107
    %p109 = scmp.eq.s32.totalorder %s15, 0
    %p110 = por %p108, %p109
    %p111 = scmp.le.s32.totalorder 1, %s9
    %p112 = scmp.lt.s32.totalorder %s9, 3
    %p113 = pnand %p111, %p112
    %p114 = pneg %p113
    // Predicated region
    $region9: #{conv_generator_forward.7} parent=5 // pred_check
      _
    $region10: #{conv_generator_forward.7} parent=5 // pred_check_branch
      %116 = sbr.rel (%p113) target = $region12
    $region11: #{conv_generator_forward.7} parent=5 // pred_region
      %s117 = ssub.s32 %s9, 1
      // Predicated region
      $region13: #{conv_generator_forward.7} parent=11 // pred_check
        %p118 = pneg %p56
      $region14: #{conv_generator_forward.7} parent=11 // pred_check_branch
        %120 = sbr.rel (%p118) target = $region16
      $region15: #{conv_generator_forward.7} parent=11 // pred_region
        _
      $region16: #{conv_generator_forward.7} parent=11 // pred_fallthru
        _
      // Predicated region
      $region17: #{conv_generator_forward.7} parent=11 // pred_check
        %p121 = pneg %p77
      $region18: #{conv_generator_forward.7} parent=11 // pred_check_branch
        %123 = sbr.rel (%p121) target = $region20
      $region19: #{conv_generator_forward.7} parent=11 // pred_region
        _
      $region20: #{conv_generator_forward.7} parent=11 // pred_fallthru
        _
    $region12: #{conv_generator_forward.7} parent=5 // pred_fallthru
      _
    %p124 = scmp.lt.s32.totalorder %s9, 2
    // Predicated region
    $region21: #{conv_generator_forward.7} parent=5 // pred_check
      %p125 = pneg %p124
    $region22: #{conv_generator_forward.7} parent=5 // pred_check_branch
      %127 = sbr.rel (%p125) target = $region24
    $region23: #{conv_generator_forward.7} parent=5 // pred_region
      // Predicated region
      $region25: #{conv_generator_forward.7} parent=23 // pred_check
        %p128 = pneg %p29
      $region26: #{conv_generator_forward.7} parent=23 // pred_check_branch
        %130 = sbr.rel (%p128) target = $region28
      $region27: #{conv_generator_forward.7} parent=23 // pred_region
        %p131 = scmp.lt.s32.totalorder %s9, 1
        %s132 = scalar_select %p131, %s9, 1
        %s133 = smul.addr %s132, 112
        %s134 = smul.addr %s133, 4
        %s135 = scalar_lea.vmem %s0, %s134
      $region28: #{conv_generator_forward.7} parent=23 // pred_fallthru
        _
    $region24: #{conv_generator_forward.7} parent=5 // pred_fallthru
      _
    %p136 = scmp.le.s32.totalorder 1, %s9
    %p137 = scmp.lt.s32.totalorder %s9, 3
    %p138 = pnand %p136, %p137
    %p139 = pneg %p138
    // Predicated region
    $region29: #{conv_generator_forward.7} parent=5 // pred_check
      _
    $region30: #{conv_generator_forward.7} parent=5 // pred_check_branch
      %141 = sbr.rel (%p138) target = $region32
    $region31: #{conv_generator_forward.7} parent=5 // pred_region
      %s142 = ssub.s32 %s9, 1
      %p143 = scmp.lt.s32.totalorder %s14, 1
      %s144 = scalar_select %p143, %s14, 1
      %s145 = smul.addr %s144, 112
      %s146 = smul.addr %s145, 4
      %s147 = scalar_lea.vmem %s0, %s146
      %p148 = pneg %p35
      %p149 = pneg %p32
      %p150 = pneg %p56
      %p151 = pneg %p53
      %p152 = pneg %p77
      %p153 = pneg %p74
      %p154 = pneg %p103
      %p155 = pneg %p100
      %p156 = scmp.lt.s32.totalorder %s14, 1
      %s157 = scalar_select %p156, %s14, 1
      %s158 = smul.addr %s157, 7
      %s159 = smul.addr %s158, 4
      %s160 = scalar_lea.vmem %s3, %s159
      %p161 = scmp.lt.s32.totalorder %s14, 1
      %s162 = scalar_select %p161, %s14, 1
      %s163 = smul.addr %s162, 112
      %s164 = smul.addr %s163, 4
      %s165 = scalar_lea.vmem %s0, %s164
      %p166 = scmp.lt.s32.totalorder %s14, 1
      %s167 = scalar_select %p166, %s14, 1
      %s168 = smul.addr %s167, 7
      %s169 = smul.addr %s168, 4
      %s170 = scalar_lea.vmem %s3, %s169
      %v172 = vld [vmem:[%s1] sm:$0x3]
      %v173 = vld [vmem:[%s165] sm:$0xff]
      %v174 = vld [vmem:[%s165 + $0x8] sm:$0xff]
      %v175 = vld [vmem:[%s165 + $0x10] sm:$0xff]
      %v176 = vld [vmem:[%s165 + $0x18] sm:$0xf]
      %v177 = vld [vmem:[%s165 + $0x1c] sm:$0xff]
      %v178 = vld [vmem:[%s165 + $0x24] sm:$0xff]
      %v179 = vld [vmem:[%s165 + $0x2c] sm:$0xff]
      %v180 = vld [vmem:[%s165 + $0x34] sm:$0xf]
      %v181 = vld [vmem:[%s165 + $0x38] sm:$0xff]
      %v182 = vld [vmem:[%s165 + $0x40] sm:$0xff]
      %v183 = vld [vmem:[%s165 + $0x48] sm:$0xff]
      %v184 = vld [vmem:[%s165 + $0x50] sm:$0xf]
      %v185 = vld [vmem:[%s165 + $0x54] sm:$0xff]
      %v186 = vld [vmem:[%s165 + $0x5c] sm:$0xff]
      %v187 = vld [vmem:[%s165 + $0x64] sm:$0xff]
      %v188 = vld [vmem:[%s165 + $0x6c] sm:$0xf]
      %v189 = vld [vmem:[%s165 + $0x70] sm:$0xff]
      %v190 = vld [vmem:[%s165 + $0x78] sm:$0xff]
      %v191 = vld [vmem:[%s165 + $0x80] sm:$0xff]
      %v192 = vld [vmem:[%s165 + $0x88] sm:$0xf]
      %v193 = vld [vmem:[%s165 + $0x8c] sm:$0xff]
      %v194 = vld [vmem:[%s165 + $0x94] sm:$0xff]
      %v195 = vld [vmem:[%s165 + $0x9c] sm:$0xff]
      %v196 = vld [vmem:[%s165 + $0xa4] sm:$0xf]
      %v197 = vld [vmem:[%s165 + $0xa8] sm:$0xff]
      %v198 = vld [vmem:[%s165 + $0xb0] sm:$0xff]
      %v199 = vld [vmem:[%s165 + $0xb8] sm:$0xff]
      %v200 = vld [vmem:[%s165 + $0xc0] sm:$0xf]
      %v201 = vld [vmem:[%s165 + $0xc4] sm:$0xff]
      %v202 = vld [vmem:[%s165 + $0xcc] sm:$0xff]
      %v203 = vld [vmem:[%s165 + $0xd4] sm:$0xff]
      %v204 = vld [vmem:[%s165 + $0xdc] sm:$0xf]
      %v205 = vld [vmem:[%s165 + $0xe0] sm:$0xff]
      %v206 = vld [vmem:[%s165 + $0xe8] sm:$0xff]
      %v207 = vld [vmem:[%s165 + $0xf0] sm:$0xff]
      %v208 = vld [vmem:[%s165 + $0xf8] sm:$0xf]
      %v209 = vld [vmem:[%s165 + $0xfc] sm:$0xff]
      %v210 = vld [vmem:[%s165 + $0x104] sm:$0xff]
      %v211 = vld [vmem:[%s165 + $0x10c] sm:$0xff]
      %v212 = vld [vmem:[%s165 + $0x114] sm:$0xf]
      %v213 = vld [vmem:[%s165 + $0x118] sm:$0xff]
      %v214 = vld [vmem:[%s165 + $0x120] sm:$0xff]
      %v215 = vld [vmem:[%s165 + $0x128] sm:$0xff]
      %v216 = vld [vmem:[%s165 + $0x130] sm:$0xf]
      %v217 = vld [vmem:[%s165 + $0x134] sm:$0xff]
      %v218 = vld [vmem:[%s165 + $0x13c] sm:$0xff]
      %v219 = vld [vmem:[%s165 + $0x144] sm:$0xff]
      %v220 = vld [vmem:[%s165 + $0x14c] sm:$0xf]
      %v221 = vld [vmem:[%s165 + $0x150] sm:$0xff]
      %v222 = vld [vmem:[%s165 + $0x158] sm:$0xff]
      %v223 = vld [vmem:[%s165 + $0x160] sm:$0xff]
      %v224 = vld [vmem:[%s165 + $0x168] sm:$0xf]
      %v225 = vld [vmem:[%s165 + $0x16c] sm:$0xff]
      %v226 = vld [vmem:[%s165 + $0x174] sm:$0xff]
      %v227 = vld [vmem:[%s165 + $0x17c] sm:$0xff]
      %v228 = vld [vmem:[%s165 + $0x184] sm:$0xf]
      %v229 = vld [vmem:[%s165 + $0x188] sm:$0xff]
      %v230 = vld [vmem:[%s165 + $0x190] sm:$0xff]
      %v231 = vld [vmem:[%s165 + $0x198] sm:$0xff]
      %v232 = vld [vmem:[%s165 + $0x1a0] sm:$0xf]
      %v233 = vld [vmem:[%s165 + $0x1a4] sm:$0xff]
      %v234 = vld [vmem:[%s165 + $0x1ac] sm:$0xff]
      %v235 = vld [vmem:[%s165 + $0x1b4] sm:$0xff]
      %v236 = vld [vmem:[%s165 + $0x1bc] sm:$0xf]
      %v237 = vld [vmem:[%s2] sm:$0x7]
      %239 = vset.pattern.permute.xlu0 0
      %240 = vperm.xlu0 %239, %v237
      %v241 = vpop.permute.xlu0 %240
      %v307 = vunpack.c.l.b16 %v173
      %v308 = vunpack.c.h.b16 %v173
      %v309 = vunpack.c.l.b16 %v174
      %v310 = vunpack.c.h.b16 %v174
      %v311 = vunpack.c.l.b16 %v175
      %v312 = vunpack.c.h.b16 %v175
      %v313 = vunpack.c.l.b16 %v176
      %v314 = vunpack.c.l.b16 %v177
      %v315 = vunpack.c.h.b16 %v177
      %v316 = vunpack.c.l.b16 %v178
      %v317 = vunpack.c.h.b16 %v178
      %v318 = vunpack.c.l.b16 %v179
      %v319 = vunpack.c.h.b16 %v179
      %v320 = vunpack.c.l.b16 %v180
      %v321 = vunpack.c.l.b16 %v181
      %v322 = vunpack.c.h.b16 %v181
      %v323 = vunpack.c.l.b16 %v182
      %v324 = vunpack.c.h.b16 %v182
      %v325 = vunpack.c.l.b16 %v183
      %v326 = vunpack.c.h.b16 %v183
      %v327 = vunpack.c.l.b16 %v184
      %v328 = vunpack.c.l.b16 %v185
      %v329 = vunpack.c.h.b16 %v185
      %v330 = vunpack.c.l.b16 %v186
      %v331 = vunpack.c.h.b16 %v186
      %v332 = vunpack.c.l.b16 %v187
      %v333 = vunpack.c.h.b16 %v187
      %v334 = vunpack.c.l.b16 %v188
      %v335 = vunpack.c.l.b16 %v189
      %v336 = vunpack.c.h.b16 %v189
      %v337 = vunpack.c.l.b16 %v190
      %v338 = vunpack.c.h.b16 %v190
      %v339 = vunpack.c.l.b16 %v191
      %v340 = vunpack.c.h.b16 %v191
      %v341 = vunpack.c.l.b16 %v192
      %v342 = vunpack.c.l.b16 %v193
      %v343 = vunpack.c.h.b16 %v193
      %v344 = vunpack.c.l.b16 %v194
      %v345 = vunpack.c.h.b16 %v194
      %v346 = vunpack.c.l.b16 %v195
      %v347 = vunpack.c.h.b16 %v195
      %v348 = vunpack.c.l.b16 %v196
      %v349 = vunpack.c.l.b16 %v197
      %v350 = vunpack.c.h.b16 %v197
      %v351 = vunpack.c.l.b16 %v198
      %v352 = vunpack.c.h.b16 %v198
      %v353 = vunpack.c.l.b16 %v199
      %v354 = vunpack.c.h.b16 %v199
      %v355 = vunpack.c.l.b16 %v200
      %v356 = vunpack.c.l.b16 %v201
      %v357 = vunpack.c.h.b16 %v201
      %v358 = vunpack.c.l.b16 %v202
      %v359 = vunpack.c.h.b16 %v202
      %v360 = vunpack.c.l.b16 %v203
      %v361 = vunpack.c.h.b16 %v203
      %v362 = vunpack.c.l.b16 %v204
      %v363 = vunpack.c.l.b16 %v205
      %v364 = vunpack.c.h.b16 %v205
      %v365 = vunpack.c.l.b16 %v206
      %v366 = vunpack.c.h.b16 %v206
      %v367 = vunpack.c.l.b16 %v207
      %v368 = vunpack.c.h.b16 %v207
      %v369 = vunpack.c.l.b16 %v208
      %v370 = vunpack.c.l.b16 %v209
      %v371 = vunpack.c.h.b16 %v209
      %v372 = vunpack.c.l.b16 %v210
      %v373 = vunpack.c.h.b16 %v210
      %v374 = vunpack.c.l.b16 %v211
      %v375 = vunpack.c.h.b16 %v211
      %v376 = vunpack.c.l.b16 %v212
      %v377 = vunpack.c.l.b16 %v213
      %v378 = vunpack.c.h.b16 %v213
      %v379 = vunpack.c.l.b16 %v214
      %v380 = vunpack.c.h.b16 %v214
      %v381 = vunpack.c.l.b16 %v215
      %v382 = vunpack.c.h.b16 %v215
      %v383 = vunpack.c.l.b16 %v216
      %v384 = vunpack.c.l.b16 %v217
      %v385 = vunpack.c.h.b16 %v217
      %v386 = vunpack.c.l.b16 %v218
      %v387 = vunpack.c.h.b16 %v218
      %v388 = vunpack.c.l.b16 %v219
      %v389 = vunpack.c.h.b16 %v219
      %v390 = vunpack.c.l.b16 %v220
      %v391 = vunpack.c.l.b16 %v221
      %v392 = vunpack.c.h.b16 %v221
      %v393 = vunpack.c.l.b16 %v222
      %v394 = vunpack.c.h.b16 %v222
      %v395 = vunpack.c.l.b16 %v223
      %v396 = vunpack.c.h.b16 %v223
      %v397 = vunpack.c.l.b16 %v224
      %v398 = vunpack.c.l.b16 %v225
      %v399 = vunpack.c.h.b16 %v225
      %v400 = vunpack.c.l.b16 %v226
      %v401 = vunpack.c.h.b16 %v226
      %v402 = vunpack.c.l.b16 %v227
      %v403 = vunpack.c.h.b16 %v227
      %v404 = vunpack.c.l.b16 %v228
      %v405 = vunpack.c.l.b16 %v229
      %v406 = vunpack.c.h.b16 %v229
      %v407 = vunpack.c.l.b16 %v230
      %v408 = vunpack.c.h.b16 %v230
      %v409 = vunpack.c.l.b16 %v231
      %v410 = vunpack.c.h.b16 %v231
      %v411 = vunpack.c.l.b16 %v232
      %v412 = vunpack.c.l.b16 %v233
      %v413 = vunpack.c.h.b16 %v233
      %v414 = vunpack.c.l.b16 %v234
      %v415 = vunpack.c.h.b16 %v234
      %v416 = vunpack.c.l.b16 %v235
      %v417 = vunpack.c.h.b16 %v235
      %v418 = vunpack.c.l.b16 %v236
      %v419 = vpack.c.b16 %v314, %v307
      %v420 = vpack.c.b16 %v315, %v308
      %v421 = vpack.c.b16 %v316, %v309
      %v422 = vpack.c.b16 %v317, %v310
      %v423 = vpack.c.b16 %v318, %v311
      %v424 = vpack.c.b16 %v319, %v312
      %v425 = vpack.c.b16 %v320, %v313
      %v426 = vpack.c.b16 %v328, %v321
      %v427 = vpack.c.b16 %v329, %v322
      %v428 = vpack.c.b16 %v330, %v323
      %v429 = vpack.c.b16 %v331, %v324
      %v430 = vpack.c.b16 %v332, %v325
      %v431 = vpack.c.b16 %v333, %v326
      %v432 = vpack.c.b16 %v334, %v327
      %v433 = vpack.c.b16 %v342, %v335
      %v434 = vpack.c.b16 %v343, %v336
      %v435 = vpack.c.b16 %v344, %v337
      %v436 = vpack.c.b16 %v345, %v338
      %v437 = vpack.c.b16 %v346, %v339
      %v438 = vpack.c.b16 %v347, %v340
      %v439 = vpack.c.b16 %v348, %v341
      %v440 = vpack.c.b16 %v356, %v349
      %v441 = vpack.c.b16 %v357, %v350
      %v442 = vpack.c.b16 %v358, %v351
      %v443 = vpack.c.b16 %v359, %v352
      %v444 = vpack.c.b16 %v360, %v353
      %v445 = vpack.c.b16 %v361, %v354
      %v446 = vpack.c.b16 %v362, %v355
      %v447 = vpack.c.b16 %v370, %v363
      %v448 = vpack.c.b16 %v371, %v364
      %v449 = vpack.c.b16 %v372, %v365
      %v450 = vpack.c.b16 %v373, %v366
      %v451 = vpack.c.b16 %v374, %v367
      %v452 = vpack.c.b16 %v375, %v368
      %v453 = vpack.c.b16 %v376, %v369
      %v454 = vpack.c.b16 %v384, %v377
      %v455 = vpack.c.b16 %v385, %v378
      %v456 = vpack.c.b16 %v386, %v379
      %v457 = vpack.c.b16 %v387, %v380
      %v458 = vpack.c.b16 %v388, %v381
      %v459 = vpack.c.b16 %v389, %v382
      %v460 = vpack.c.b16 %v390, %v383
      %v461 = vpack.c.b16 %v398, %v391
      %v462 = vpack.c.b16 %v399, %v392
      %v463 = vpack.c.b16 %v400, %v393
      %v464 = vpack.c.b16 %v401, %v394
      %v465 = vpack.c.b16 %v402, %v395
      %v466 = vpack.c.b16 %v403, %v396
      %v467 = vpack.c.b16 %v404, %v397
      %v468 = vpack.c.b16 %v412, %v405
      %v469 = vpack.c.b16 %v413, %v406
      %v470 = vpack.c.b16 %v414, %v407
      %v471 = vpack.c.b16 %v415, %v408
      %v472 = vpack.c.b16 %v416, %v409
      %v473 = vpack.c.b16 %v417, %v410
      %v474 = vpack.c.b16 %v418, %v411
      %531 = vmatprep.subr.bf16.mxu0 %v420
      %532 = vmatpush1.bf16.msra.mxu0 %v419
      %533 = vmatprep.subr.bf16.mxu0 %v427
      %534 = vmatpush1.bf16.msra.mxu0 %v426
      %535 = vmatprep.subr.bf16.mxu0 %v434
      %536 = vmatpush1.bf16.msra.mxu0 %v433
      %537 = vmatprep.subr.bf16.mxu0 %v441
      %538 = vmatpush1.bf16.msra.mxu0 %v440
      %539 = vmatprep.subr.bf16.mxu0 %v448
      %540 = vmatpush1.bf16.msra.mxu0 %v447
      %541 = vmatprep.subr.bf16.mxu0 %v455
      %542 = vmatpush1.bf16.msra.mxu0 %v454
      %543 = vmatprep.subr.bf16.mxu0 %v462
      %544 = vmatpush1.bf16.msra.mxu0 %v461
      %545 = vmatprep.subr.bf16.mxu0 %v469
      %546 = vmatpush1.bf16.msra.mxu0 %v468
      %547 = vmatprep.subr.bf16.mxu0 0
      %548 = vmatpush1.bf16.msra.mxu0 0
      %549 = vmatprep.subr.bf16.mxu0 0
      %550 = vmatpush1.bf16.msra.mxu0 0
      %551 = vmatprep.subr.bf16.mxu0 0
      %552 = vmatpush1.bf16.msra.mxu0 0
      %553 = vmatprep.subr.bf16.mxu0 0
      %554 = vmatpush1.bf16.msra.mxu0 0
      %555 = vmatprep.subr.bf16.mxu0 0
      %556 = vmatpush1.bf16.msra.mxu0 0
      %557 = vmatprep.subr.bf16.mxu0 0
      %558 = vmatpush1.bf16.msra.mxu0 0
      %559 = vmatprep.subr.bf16.mxu0 0
      %560 = vmatpush1.bf16.msra.mxu0 0
      %561 = vmatprep.subr.bf16.mxu0 0
      %562 = vmatpush1.bf16.msra.mxu0 0
      %563 = vmatprep.mubr.bf16.mxu0 0
      %564 = vmatmul.mubr.bf16.gmra.mrb[0].mxu0 %v172
      %v565 = vpop.f32.mrb[0].mxu0
      %v566 = vadd.f32 %v241, %v565
      %v567 = vpop.f32.mrb[0].mxu0
      %v568 = vadd.f32 %v241, %v567
      %v569 = vpop.f32.mrb[0].mxu0
      %v570 = vpop.f32.mrb[0].mxu0
      %571 = vdwg.mxu0
      %572 = vmatprep.subr.bf16.mxu0 %v422
      %573 = vmatpush1.bf16.msra.mxu0 %v421
      %574 = vmatprep.subr.bf16.mxu0 %v429
      %575 = vmatpush1.bf16.msra.mxu0 %v428
      %576 = vmatprep.subr.bf16.mxu0 %v436
      %577 = vmatpush1.bf16.msra.mxu0 %v435
      %578 = vmatprep.subr.bf16.mxu0 %v443
      %579 = vmatpush1.bf16.msra.mxu0 %v442
      %580 = vmatprep.subr.bf16.mxu0 %v450
      %581 = vmatpush1.bf16.msra.mxu0 %v449
      %582 = vmatprep.subr.bf16.mxu0 %v457
      %583 = vmatpush1.bf16.msra.mxu0 %v456
      %584 = vmatprep.subr.bf16.mxu0 %v464
      %585 = vmatpush1.bf16.msra.mxu0 %v463
      %586 = vmatprep.subr.bf16.mxu0 %v471
      %587 = vmatpush1.bf16.msra.mxu0 %v470
      %588 = vmatprep.subr.bf16.mxu0 0
      %589 = vmatpush1.bf16.msra.mxu0 0
      %590 = vmatprep.subr.bf16.mxu0 0
      %591 = vmatpush1.bf16.msra.mxu0 0
      %592 = vmatprep.subr.bf16.mxu0 0
      %593 = vmatpush1.bf16.msra.mxu0 0
      %594 = vmatprep.subr.bf16.mxu0 0
      %595 = vmatpush1.bf16.msra.mxu0 0
      %596 = vmatprep.subr.bf16.mxu0 0
      %597 = vmatpush1.bf16.msra.mxu0 0
      %598 = vmatprep.subr.bf16.mxu0 0
      %599 = vmatpush1.bf16.msra.mxu0 0
      %600 = vmatprep.subr.bf16.mxu0 0
      %601 = vmatpush1.bf16.msra.mxu0 0
      %602 = vmatprep.subr.bf16.mxu0 0
      %603 = vmatpush1.bf16.msra.mxu0 0
      %604 = vmatprep.mubr.bf16.mxu0 0
      %605 = vmatmul.mubr.bf16.gmra.mrb[0].mxu0 %v172
      %v606 = vpop.f32.mrb[0].mxu0
      %v607 = vadd.f32 %v241, %v606
      %v608 = vpop.f32.mrb[0].mxu0
      %v609 = vadd.f32 %v241, %v608
      %v610 = vpop.f32.mrb[0].mxu0
      %v611 = vpop.f32.mrb[0].mxu0
      %612 = vdwg.mxu0
      %613 = vmatprep.subr.bf16.mxu0 %v424
      %614 = vmatpush1.bf16.msra.mxu0 %v423
      %615 = vmatprep.subr.bf16.mxu0 %v431
      %616 = vmatpush1.bf16.msra.mxu0 %v430
      %617 = vmatprep.subr.bf16.mxu0 %v438
      %618 = vmatpush1.bf16.msra.mxu0 %v437
      %619 = vmatprep.subr.bf16.mxu0 %v445
      %620 = vmatpush1.bf16.msra.mxu0 %v444
      %621 = vmatprep.subr.bf16.mxu0 %v452
      %622 = vmatpush1.bf16.msra.mxu0 %v451
      %623 = vmatprep.subr.bf16.mxu0 %v459
      %624 = vmatpush1.bf16.msra.mxu0 %v458
      %625 = vmatprep.subr.bf16.mxu0 %v466
      %626 = vmatpush1.bf16.msra.mxu0 %v465
      %627 = vmatprep.subr.bf16.mxu0 %v473
      %628 = vmatpush1.bf16.msra.mxu0 %v472
      %629 = vmatprep.subr.bf16.mxu0 0
      %630 = vmatpush1.bf16.msra.mxu0 0
      %631 = vmatprep.subr.bf16.mxu0 0
      %632 = vmatpush1.bf16.msra.mxu0 0
      %633 = vmatprep.subr.bf16.mxu0 0
      %634 = vmatpush1.bf16.msra.mxu0 0
      %635 = vmatprep.subr.bf16.mxu0 0
      %636 = vmatpush1.bf16.msra.mxu0 0
      %637 = vmatprep.subr.bf16.mxu0 0
      %638 = vmatpush1.bf16.msra.mxu0 0
      %639 = vmatprep.subr.bf16.mxu0 0
      %640 = vmatpush1.bf16.msra.mxu0 0
      %641 = vmatprep.subr.bf16.mxu0 0
      %642 = vmatpush1.bf16.msra.mxu0 0
      %643 = vmatprep.subr.bf16.mxu0 0
      %644 = vmatpush1.bf16.msra.mxu0 0
      %645 = vmatprep.mubr.bf16.mxu0 0
      %646 = vmatmul.mubr.bf16.gmra.mrb[0].mxu0 %v172
      %v647 = vpop.f32.mrb[0].mxu0
      %v648 = vadd.f32 %v241, %v647
      %v649 = vpop.f32.mrb[0].mxu0
      %v650 = vadd.f32 %v241, %v649
      %v651 = vpop.f32.mrb[0].mxu0
      %v652 = vpop.f32.mrb[0].mxu0
      %653 = vdwg.mxu0
      %654 = vmatprep.subr.bf16.mxu0 0
      %655 = vmatpush1.bf16.msra.mxu0 %v425
      %656 = vmatprep.subr.bf16.mxu0 0
      %657 = vmatpush1.bf16.msra.mxu0 %v432
      %658 = vmatprep.subr.bf16.mxu0 0
      %659 = vmatpush1.bf16.msra.mxu0 %v439
      %660 = vmatprep.subr.bf16.mxu0 0
      %661 = vmatpush1.bf16.msra.mxu0 %v446
      %662 = vmatprep.subr.bf16.mxu0 0
      %663 = vmatpush1.bf16.msra.mxu0 %v453
      %664 = vmatprep.subr.bf16.mxu0 0
      %665 = vmatpush1.bf16.msra.mxu0 %v460
      %666 = vmatprep.subr.bf16.mxu0 0
      %667 = vmatpush1.bf16.msra.mxu0 %v467
      %668 = vmatprep.subr.bf16.mxu0 0
      %669 = vmatpush1.bf16.msra.mxu0 %v474
      %670 = vmatprep.subr.bf16.mxu0 0
      %671 = vmatpush1.bf16.msra.mxu0 0
      %672 = vmatprep.subr.bf16.mxu0 0
      %673 = vmatpush1.bf16.msra.mxu0 0
      %674 = vmatprep.subr.bf16.mxu0 0
      %675 = vmatpush1.bf16.msra.mxu0 0
      %676 = vmatprep.subr.bf16.mxu0 0
      %677 = vmatpush1.bf16.msra.mxu0 0
      %678 = vmatprep.subr.bf16.mxu0 0
      %679 = vmatpush1.bf16.msra.mxu0 0
      %680 = vmatprep.subr.bf16.mxu0 0
      %681 = vmatpush1.bf16.msra.mxu0 0
      %682 = vmatprep.subr.bf16.mxu0 0
      %683 = vmatpush1.bf16.msra.mxu0 0
      %684 = vmatprep.subr.bf16.mxu0 0
      %685 = vmatpush1.bf16.msra.mxu0 0
      %686 = vmatprep.mubr.bf16.mxu0 0
      %687 = vmatmul.mubr.bf16.gmra.mrb[0].mxu0 %v172
      %v688 = vpop.f32.mrb[0].mxu0
      %v689 = vadd.f32 %v241, %v688
      %v690 = vpop.f32.mrb[0].mxu0
      %v691 = vpop.f32.mrb[0].mxu0
      %v692 = vpop.f32.mrb[0].mxu0
      %693 = vdwg.mxu0
      %v694 = vtanh.pop %v566
      %v695 = vtanh.pop %v568
      %v696 = vtanh.pop %v607
      %v697 = vtanh.pop %v609
      %v698 = vtanh.pop %v648
      %v699 = vtanh.pop %v650
      %v700 = vtanh.pop %v689
      %v707 = vcombine.low %v694, %v695
      %v708 = vcombine.low %v696, %v697
      %v709 = vcombine.low %v698, %v699
      %713 = vst [vmem:[%s170] sm:$0x77] %v707
      %714 = vst [vmem:[%s170 + $0x8] sm:$0x77] %v708
      %715 = vst [vmem:[%s170 + $0x10] sm:$0x77] %v709
      %vm716 = vcmask 124928
      %717 = vst.msk [vmem:[%s170 + $0x18] sm:$0x7] %vm716, %v700
      %p718 = scmp.lt.s32.totalorder %s14, 1
      %s719 = scalar_select %p718, %s14, 1
      %s720 = smul.addr %s719, 7
      %s721 = smul.addr %s720, 4
      %s722 = scalar_lea.vmem %s3, %s721
      // Predicated region
      $region33: #{conv_generator_forward.7} parent=31 // pred_check
        %p723 = pneg %p100
      $region34: #{conv_generator_forward.7} parent=31 // pred_check_branch
        %725 = sbr.rel (%p723) target = $region36
      $region35: #{conv_generator_forward.7} parent=31 // pred_region
        _
      $region36: #{conv_generator_forward.7} parent=31 // pred_fallthru
        _
    $region32: #{conv_generator_forward.7} parent=5 // pred_fallthru
      _
    %p726 = scmp.le.s32.totalorder 2, %s9
    // Predicated region
    $region37: #{conv_generator_forward.7} parent=5 // pred_check
      %p727 = pneg %p726
    $region38: #{conv_generator_forward.7} parent=5 // pred_check_branch
      %729 = sbr.rel (%p727) target = $region40
    $region39: #{conv_generator_forward.7} parent=5 // pred_region
      %s730 = ssub.s32 %s9, 2
      // Predicated region
      $region41: #{conv_generator_forward.7} parent=39 // pred_check
        %p731 = pneg %p106
      $region42: #{conv_generator_forward.7} parent=39 // pred_check_branch
        %733 = sbr.rel (%p731) target = $region44
      $region43: #{conv_generator_forward.7} parent=39 // pred_region
        %p734 = scmp.lt.s32.totalorder %s15, 1
        %s735 = scalar_select %p734, %s15, 1
        %s736 = smul.addr %s735, 7
        %s737 = smul.addr %s736, 4
        %s738 = scalar_lea.vmem %s3, %s737
      $region44: #{conv_generator_forward.7} parent=39 // pred_fallthru
        _
    $region40: #{conv_generator_forward.7} parent=5 // pred_fallthru
      _
  $region6: #{conv_generator_forward.7} parent=0 // loop_footer
    %s13 = sadd.s32 1, %s9
  $region7: #{conv_generator_forward.7} parent=0 // loop_footer_branch
    %8 = sbr.rel target = $region3
  $region8: #{conv_generator_forward.7} parent=0 // loop_exit
    _

</llo_original>
